<compile_context>
chip_gen: v6e
topology: v6e:2x2x1
jax: 0.10.0
libtpu: 0.0.40
codegen_flags: <defaults>
</compile_context>

<pallas_src>
import functools

import jax
import jax.numpy as jnp
from jax import lax
from jax.experimental import pallas as pl
from jax.experimental.pallas import tpu as pltpu

_LANE = 128
_SUBLANE = 8


def _round_up(n, m):
    return ((n + m - 1) // m) * m


def _weight_norm(v, g):
    """PyTorch weight_norm (dim=0): w = g * v / ||v||, norm per out-channel."""
    norm = jnp.sqrt(jnp.sum(v * v, axis=tuple(range(1, v.ndim)), keepdims=True))
    g = g.reshape((-1,) + (1,) * (v.ndim - 1))
    return v * (g / norm)


def _pads_for_level(level, kernel_size):
    d = 2 ** level
    p = (kernel_size - 1) * d          # PyTorch padding == chomp_size
    # Spec's Chomp1d: odd p -> keep [:-p] (front pad p);
    #                 even p -> keep [p/2:-p/2] (front pad p/2, centered).
    pf = p if (p % 2 != 0) else p // 2
    return d, p, pf


# -----------------------------------------------------------------------------
# Fused whole-network kernel.
# -----------------------------------------------------------------------------
def _shifted_rows(h, s):
    """a[t] = h[t + s] if 0 <= t + s < L else 0  (static shift, shape (L, C))."""
    L, C = h.shape
    if s == 0:
        return h
    if s >= L or s <= -L:
        return jnp.zeros_like(h)
    if s > 0:
        return jnp.concatenate([h[s:, :], jnp.zeros((s, C), h.dtype)], axis=0)
    s = -s
    return jnp.concatenate([jnp.zeros((s, C), h.dtype), h[:L - s, :]], axis=0)


def _conv_operand(h, k, d, pf, compute_dtype):
    """Lane-concat of the k dilated taps -> (L, k*C) single-matmul operand."""
    views = [_shifted_rows(h, j * d - pf) for j in range(k)]
    op = views[0] if k == 1 else jnp.concatenate(views, axis=-1)
    return op.astype(compute_dtype)


def _tcn_kernel(*refs, k, levels, compute_dtype):
    x_ref = refs[0]
    o_ref = refs[-1]
    wrefs = refs[1:-1]
    f32 = jnp.float32

    h = x_ref[0].astype(f32)                 # (L, C_pad), stays in f32 values
    wi = 0
    for (d, pf, has_down) in levels:         # static Python loop over levels
        w1 = wrefs[wi][...]
        b1 = wrefs[wi + 1][...]
        w2 = wrefs[wi + 2][...]
        b2 = wrefs[wi + 3][...]
        wi += 4
        if has_down:
            wd = wrefs[wi][...]
            bd = wrefs[wi + 1][...]
            wi += 2

        # conv1: k dilated taps fused into one (L, k*C) @ (k*C, C) MXU matmul
        op1 = _conv_operand(h, k, d, pf, compute_dtype)
        h1 = jnp.maximum(jnp.dot(op1, w1, preferred_element_type=f32) + b1, 0.0)
        # TODO(synk): nn.Dropout == identity here (eval-mode forward).

        # conv2
        op2 = _conv_operand(h1, k, d, pf, compute_dtype)
        h2 = jnp.maximum(jnp.dot(op2, w2, preferred_element_type=f32) + b2, 0.0)

        # residual (1x1 conv when channel counts differ) + final ReLU
        if has_down:
            res = jnp.dot(h.astype(compute_dtype), wd,
                          preferred_element_type=f32) + bd
        else:
            res = h
        h = jnp.maximum(h2 + res, 0.0)

    o_ref[0] = h.astype(o_ref.dtype)


def _vmem_limit_bytes(need_bytes):
    try:
        cap = int(getattr(pltpu.get_tpu_info(), "vmem_capacity_bytes",
                          64 * 1024 * 1024))
    except Exception:  # pragma: no cover - conservative fallback
        cap = 64 * 1024 * 1024
    lim = max(2 * need_bytes, 32 * 1024 * 1024)
    return int(min(lim, cap * 3 // 4))


# -----------------------------------------------------------------------------
# Full TemporalConvNet forward (wrapper).
# -----------------------------------------------------------------------------
def temporal_conv_net(x, params, kernel_size=2, compute_dtype=jnp.bfloat16):
    """Forward pass of TemporalConvNet.  x: (N, C_in, L) -> (N, C_last, L)."""
    n, c_in, L = x.shape
    assert L % _SUBLANE == 0, "TODO(synk): pad/mask time axis for L % 8 != 0"
    channels = [blk["b1"].shape[0] for blk in params]
    c_pad = _round_up(max([c_in] + channels), _LANE)

    # (N, L, C) layout, channels lane-padded once for the whole network.
    h = jnp.transpose(x, (0, 2, 1)).astype(jnp.float32)
    h = jnp.pad(h, ((0, 0), (0, 0), (0, c_pad - c_in)))

    in_arrays = [h]
    in_specs = [pl.BlockSpec((1, L, c_pad), lambda i: (i, 0, 0))]
    levels = []
    weight_bytes = 0
    in_ch = c_in
    for i, blk in enumerate(params):
        out_ch = channels[i]
        d, _p, pf = _pads_for_level(i, kernel_size)
        has_down = "wd" in blk

        # Fold weight_norm, go to (k, C_in, C_out) tap layout, lane-pad, and
        # flatten taps into the contraction dim -> (k*C_pad, C_pad), in bf16.
        w1 = jnp.transpose(_weight_norm(blk["v1"], blk["g1"]), (2, 1, 0))
        w2 = jnp.transpose(_weight_norm(blk["v2"], blk["g2"]), (2, 1, 0))
        w1 = jnp.pad(w1, ((0, 0), (0, c_pad - in_ch), (0, c_pad - out_ch)))
        w2 = jnp.pad(w2, ((0, 0), (0, c_pad - out_ch), (0, c_pad - out_ch)))
        w1 = w1.reshape(kernel_size * c_pad, c_pad).astype(compute_dtype)
        w2 = w2.reshape(kernel_size * c_pad, c_pad).astype(compute_dtype)
        b1 = jnp.pad(blk["b1"], (0, c_pad - out_ch)).astype(jnp.float32)[None, :]
        b2 = jnp.pad(blk["b2"], (0, c_pad - out_ch)).astype(jnp.float32)[None, :]

        lvl_arrays = [w1, b1, w2, b2]
        lvl_specs = [
            pl.BlockSpec((kernel_size * c_pad, c_pad), lambda i: (0, 0)),
            pl.BlockSpec((1, c_pad), lambda i: (0, 0)),
            pl.BlockSpec((kernel_size * c_pad, c_pad), lambda i: (0, 0)),
            pl.BlockSpec((1, c_pad), lambda i: (0, 0)),
        ]
        if has_down:
            wd = jnp.transpose(blk["wd"][:, :, 0], (1, 0))
            wd = jnp.pad(wd, ((0, c_pad - in_ch), (0, c_pad - out_ch)))
            wd = wd.astype(compute_dtype)
            bd = jnp.pad(blk["bd"], (0, c_pad - out_ch)).astype(jnp.float32)[None, :]
            lvl_arrays += [wd, bd]
            lvl_specs += [
                pl.BlockSpec((c_pad, c_pad), lambda i: (0, 0)),
                pl.BlockSpec((1, c_pad), lambda i: (0, 0)),
            ]
        # TODO(synk): pipeline_mode=pl.Buffered(1) on these constant-index
        # weight specs would halve their (already tiny) VMEM footprint on v7x.
        in_arrays += lvl_arrays
        in_specs += lvl_specs
        weight_bytes += sum(int(a.size) * a.dtype.itemsize for a in lvl_arrays)
        levels.append((d, pf, has_down))
        in_ch = out_ch

    kernel = functools.partial(
        _tcn_kernel, k=kernel_size, levels=tuple(levels),
        compute_dtype=compute_dtype)

    io_bytes = L * c_pad * 4                       # one (1, L, C_pad) f32 block
    work_bytes = 12 * L * c_pad * 4                # in-kernel values (rough)
    need = 4 * io_bytes + 2 * weight_bytes + work_bytes

    out = pl.pallas_call(
        kernel,
        out_shape=jax.ShapeDtypeStruct((n, L, c_pad), jnp.float32),
        grid_spec=pltpu.PrefetchScalarGridSpec(
            num_scalar_prefetch=0,
            grid=(n,),
            in_specs=in_specs,
            out_specs=pl.BlockSpec((1, L, c_pad), lambda i: (i, 0, 0)),
        ),
        compiler_params=pltpu.CompilerParams(
            dimension_semantics=("parallel",),
            vmem_limit_bytes=_vmem_limit_bytes(need),
        ),
    )(*in_arrays)

    return jnp.transpose(out[:, :, :channels[-1]], (0, 2, 1))


# -----------------------------------------------------------------------------
# Pure-JAX reference (matches the PyTorch spec, eval mode) + params.
# -----------------------------------------------------------------------------
def temporal_conv_net_ref(x, params, kernel_size=2):
    h = x
    for i, blk in enumerate(params):
        d = 2 ** i
        p = (kernel_size - 1) * d

        def conv(z, w, b, dil, pad):
            y = lax.conv_general_dilated(
                z, w, window_strides=(1,), padding=[(pad, pad)],
                rhs_dilation=(dil,), dimension_numbers=("NCH", "OIH", "NCH"),
                precision=lax.Precision.HIGHEST)
            return y + b[None, :, None]

        def chomp(y, cs):
            if cs == 0:
                return y
            if cs % 2 != 0:
                return y[:, :, :-cs]
            return y[:, :, cs // 2:-(cs // 2)]

        w1 = _weight_norm(blk["v1"], blk["g1"])
        w2 = _weight_norm(blk["v2"], blk["g2"])
        out = jax.nn.relu(chomp(conv(h, w1, blk["b1"], d, p), p))
        out = jax.nn.relu(chomp(conv(out, w2, blk["b2"], d, p), p))
        res = conv(h, blk["wd"], blk["bd"], 1, 0) if "wd" in blk else h
        h = jax.nn.relu(out + res)
    return h


def init_tcn_params(key, num_inputs, num_channels, kernel_size):
    params = []
    in_ch = num_inputs
    for out_ch in num_channels:
        key, k1, k2, k3, k4, k5, k6, k7, k8 = jax.random.split(key, 9)
        blk = {
            "v1": 0.01 * jax.random.normal(k1, (out_ch, in_ch, kernel_size), jnp.float32),
            "g1": jax.random.uniform(k2, (out_ch,), jnp.float32, 0.5, 1.5),
            "b1": 0.05 * jax.random.normal(k3, (out_ch,), jnp.float32),
            "v2": 0.01 * jax.random.normal(k4, (out_ch, out_ch, kernel_size), jnp.float32),
            "g2": jax.random.uniform(k5, (out_ch,), jnp.float32, 0.5, 1.5),
            "b2": 0.05 * jax.random.normal(k6, (out_ch,), jnp.float32),
        }
        if in_ch != out_ch:
            blk["wd"] = 0.01 * jax.random.normal(k7, (out_ch, in_ch, 1), jnp.float32)
            blk["bd"] = 0.05 * jax.random.normal(k8, (out_ch,), jnp.float32)
        params.append(blk)
        in_ch = out_ch
    return params


if __name__ == "__main__":
    key = jax.random.PRNGKey(0)
    kx, kp = jax.random.split(key)

    N, C_IN, L = 2, 4, 16
    NUM_CHANNELS = (8, 8, 6)   # level 0/2: 1x1 downsample, level 1: identity res
    K = 2                      # padding = 1, 2, 4 -> exercises odd & even chomp

    x = jax.random.normal(kx, (N, C_IN, L), dtype=jnp.float32)
    params = init_tcn_params(kp, C_IN, NUM_CHANNELS, K)

    tcn = jax.jit(functools.partial(temporal_conv_net, kernel_size=K))
    y = jax.block_until_ready(tcn(x, params))
    y_ref = temporal_conv_net_ref(x, params, kernel_size=K)

    assert y.shape == y_ref.shape == (N, NUM_CHANNELS[-1], L), (y.shape, y_ref.shape)
    # Tolerance sized for bf16 MXU operands through 3 stacked levels vs. the
    # float32 (Precision.HIGHEST) reference; structural errors are O(1).
    if bool(jnp.allclose(y, y_ref, atol=1e-1, rtol=5e-2)):
        print("KERNEL_OK")
    else:
        print("MISMATCH max_abs_err=", float(jnp.max(jnp.abs(y - y_ref))))
</pallas_src>

<mosaic_0001>
module attributes {stable_mosaic.version = 11 : i64} {
  func.func @_tcn_kernel(%arg0: i32, %arg1: memref<1x16x128xf32, #tpu.memory_space<vmem>>, %arg2: memref<256x128xbf16, #tpu.memory_space<vmem>>, %arg3: memref<1x128xf32, #tpu.memory_space<vmem>>, %arg4: memref<256x128xbf16, #tpu.memory_space<vmem>>, %arg5: memref<1x128xf32, #tpu.memory_space<vmem>>, %arg6: memref<128x128xbf16, #tpu.memory_space<vmem>>, %arg7: memref<1x128xf32, #tpu.memory_space<vmem>>, %arg8: memref<256x128xbf16, #tpu.memory_space<vmem>>, %arg9: memref<1x128xf32, #tpu.memory_space<vmem>>, %arg10: memref<256x128xbf16, #tpu.memory_space<vmem>>, %arg11: memref<1x128xf32, #tpu.memory_space<vmem>>, %arg12: memref<256x128xbf16, #tpu.memory_space<vmem>>, %arg13: memref<1x128xf32, #tpu.memory_space<vmem>>, %arg14: memref<256x128xbf16, #tpu.memory_space<vmem>>, %arg15: memref<1x128xf32, #tpu.memory_space<vmem>>, %arg16: memref<128x128xbf16, #tpu.memory_space<vmem>>, %arg17: memref<1x128xf32, #tpu.memory_space<vmem>>, %arg18: memref<1x16x128xf32, #tpu.memory_space<vmem>>) attributes {dimension_semantics = [#tpu.dimension_semantics<parallel>], iteration_bounds = array<i64: 2>, scalar_prefetch = 0 : i64, scratch_operands = 0 : i64, tpu.core_type = #tpu.core_type<tc>, window_params = [{transform_indices = @transform_0, window_bounds = array<i64: 1, 16, 128>}, {pipeline_mode = #tpu.pipeline_mode<synchronous>, transform_indices = @transform_1, window_bounds = array<i64: 256, 128>}, {pipeline_mode = #tpu.pipeline_mode<synchronous>, transform_indices = @transform_2, window_bounds = array<i64: 1, 128>}, {pipeline_mode = #tpu.pipeline_mode<synchronous>, transform_indices = @transform_3, window_bounds = array<i64: 256, 128>}, {pipeline_mode = #tpu.pipeline_mode<synchronous>, transform_indices = @transform_4, window_bounds = array<i64: 1, 128>}, {pipeline_mode = #tpu.pipeline_mode<synchronous>, transform_indices = @transform_5, window_bounds = array<i64: 128, 128>}, {pipeline_mode = #tpu.pipeline_mode<synchronous>, transform_indices = @transform_6, window_bounds = array<i64: 1, 128>}, {pipeline_mode = #tpu.pipeline_mode<synchronous>, transform_indices = @transform_7, window_bounds = array<i64: 256, 128>}, {pipeline_mode = #tpu.pipeline_mode<synchronous>, transform_indices = @transform_8, window_bounds = array<i64: 1, 128>}, {pipeline_mode = #tpu.pipeline_mode<synchronous>, transform_indices = @transform_9, window_bounds = array<i64: 256, 128>}, {pipeline_mode = #tpu.pipeline_mode<synchronous>, transform_indices = @transform_10, window_bounds = array<i64: 1, 128>}, {pipeline_mode = #tpu.pipeline_mode<synchronous>, transform_indices = @transform_11, window_bounds = array<i64: 256, 128>}, {pipeline_mode = #tpu.pipeline_mode<synchronous>, transform_indices = @transform_12, window_bounds = array<i64: 1, 128>}, {pipeline_mode = #tpu.pipeline_mode<synchronous>, transform_indices = @transform_13, window_bounds = array<i64: 256, 128>}, {pipeline_mode = #tpu.pipeline_mode<synchronous>, transform_indices = @transform_14, window_bounds = array<i64: 1, 128>}, {pipeline_mode = #tpu.pipeline_mode<synchronous>, transform_indices = @transform_15, window_bounds = array<i64: 128, 128>}, {pipeline_mode = #tpu.pipeline_mode<synchronous>, transform_indices = @transform_16, window_bounds = array<i64: 1, 128>}, {transform_indices = @transform_17, window_bounds = array<i64: 1, 16, 128>}]} {
    %c0 = arith.constant 0 : index
    %c0_0 = arith.constant 0 : index
    %c0_1 = arith.constant 0 : index
    %0 = vector.load %arg1[%c0, %c0_0, %c0_1] : memref<1x16x128xf32, #tpu.memory_space<vmem>>, vector<1x16x128xf32>
    %1 = vector.shape_cast %0 : vector<1x16x128xf32> to vector<16x128xf32>
    %c0_2 = arith.constant 0 : index
    %c0_3 = arith.constant 0 : index
    %2 = vector.load %arg2[%c0_2, %c0_3] : memref<256x128xbf16, #tpu.memory_space<vmem>>, vector<256x128xbf16>
    %c0_4 = arith.constant 0 : index
    %c0_5 = arith.constant 0 : index
    %3 = vector.load %arg3[%c0_4, %c0_5] : memref<1x128xf32, #tpu.memory_space<vmem>>, vector<1x128xf32>
    %c0_6 = arith.constant 0 : index
    %c0_7 = arith.constant 0 : index
    %4 = vector.load %arg4[%c0_6, %c0_7] : memref<256x128xbf16, #tpu.memory_space<vmem>>, vector<256x128xbf16>
    %c0_8 = arith.constant 0 : index
    %c0_9 = arith.constant 0 : index
    %5 = vector.load %arg5[%c0_8, %c0_9] : memref<1x128xf32, #tpu.memory_space<vmem>>, vector<1x128xf32>
    %c0_10 = arith.constant 0 : index
    %c0_11 = arith.constant 0 : index
    %6 = vector.load %arg6[%c0_10, %c0_11] : memref<128x128xbf16, #tpu.memory_space<vmem>>, vector<128x128xbf16>
    %c0_12 = arith.constant 0 : index
    %c0_13 = arith.constant 0 : index
    %7 = vector.load %arg7[%c0_12, %c0_13] : memref<1x128xf32, #tpu.memory_space<vmem>>, vector<1x128xf32>
    %cst = arith.constant 0.000000e+00 : f32
    %8 = vector.broadcast %cst : f32 to vector<1x128xf32>
    %9 = vector.extract_strided_slice %1 {offsets = [0, 0], sizes = [15, 128], strides = [1, 1]} : vector<16x128xf32> to vector<15x128xf32>
    %10 = tpu.concatenate %8, %9 in 0 : vector<1x128xf32>, vector<15x128xf32> -> vector<16x128xf32>
    %11 = tpu.concatenate %10, %1 in 1 : vector<16x128xf32>, vector<16x128xf32> -> vector<16x256xf32>
    %12 = arith.truncf %11 : vector<16x256xf32> to vector<16x256xbf16>
    %cst_14 = arith.constant dense<0.000000e+00> : vector<16x128xf32>
    %13 = tpu.matmul %12, %2, %cst_14 {dimension_numbers = #tpu.dot_dimension_numbers<[1], [0], [0], [1], [0, 0, 1, 1], [], []>} : vector<16x256xbf16>, vector<256x128xbf16>, vector<16x128xf32> -> vector<16x128xf32>
    %14 = vector.broadcast %3 : vector<1x128xf32> to vector<16x128xf32>
    %15 = arith.addf %13, %14 : vector<16x128xf32>
    %cst_15 = arith.constant 0.000000e+00 : f32
    %16 = vector.broadcast %cst_15 : f32 to vector<16x128xf32>
    %17 = arith.maximumf %15, %16 : vector<16x128xf32>
    %cst_16 = arith.constant 0.000000e+00 : f32
    %18 = vector.broadcast %cst_16 : f32 to vector<1x128xf32>
    %19 = vector.extract_strided_slice %17 {offsets = [0, 0], sizes = [15, 128], strides = [1, 1]} : vector<16x128xf32> to vector<15x128xf32>
    %20 = tpu.concatenate %18, %19 in 0 : vector<1x128xf32>, vector<15x128xf32> -> vector<16x128xf32>
    %21 = tpu.concatenate %20, %17 in 1 : vector<16x128xf32>, vector<16x128xf32> -> vector<16x256xf32>
    %22 = arith.truncf %21 : vector<16x256xf32> to vector<16x256xbf16>
    %cst_17 = arith.constant dense<0.000000e+00> : vector<16x128xf32>
    %23 = tpu.matmul %22, %4, %cst_17 {dimension_numbers = #tpu.dot_dimension_numbers<[1], [0], [0], [1], [0, 0, 1, 1], [], []>} : vector<16x256xbf16>, vector<256x128xbf16>, vector<16x128xf32> -> vector<16x128xf32>
    %24 = vector.broadcast %5 : vector<1x128xf32> to vector<16x128xf32>
    %25 = arith.addf %23, %24 : vector<16x128xf32>
    %cst_18 = arith.constant 0.000000e+00 : f32
    %26 = vector.broadcast %cst_18 : f32 to vector<16x128xf32>
    %27 = arith.maximumf %25, %26 : vector<16x128xf32>
    %28 = arith.truncf %1 : vector<16x128xf32> to vector<16x128xbf16>
    %cst_19 = arith.constant dense<0.000000e+00> : vector<16x128xf32>
    %29 = tpu.matmul %28, %6, %cst_19 {dimension_numbers = #tpu.dot_dimension_numbers<[1], [0], [0], [1], [0, 0, 1, 1], [], []>} : vector<16x128xbf16>, vector<128x128xbf16>, vector<16x128xf32> -> vector<16x128xf32>
    %30 = vector.broadcast %7 : vector<1x128xf32> to vector<16x128xf32>
    %31 = arith.addf %29, %30 : vector<16x128xf32>
    %32 = arith.addf %27, %31 : vector<16x128xf32>
    %cst_20 = arith.constant 0.000000e+00 : f32
    %33 = vector.broadcast %cst_20 : f32 to vector<16x128xf32>
    %34 = arith.maximumf %32, %33 : vector<16x128xf32>
    %c0_21 = arith.constant 0 : index
    %c0_22 = arith.constant 0 : index
    %35 = vector.load %arg8[%c0_21, %c0_22] : memref<256x128xbf16, #tpu.memory_space<vmem>>, vector<256x128xbf16>
    %c0_23 = arith.constant 0 : index
    %c0_24 = arith.constant 0 : index
    %36 = vector.load %arg9[%c0_23, %c0_24] : memref<1x128xf32, #tpu.memory_space<vmem>>, vector<1x128xf32>
    %c0_25 = arith.constant 0 : index
    %c0_26 = arith.constant 0 : index
    %37 = vector.load %arg10[%c0_25, %c0_26] : memref<256x128xbf16, #tpu.memory_space<vmem>>, vector<256x128xbf16>
    %c0_27 = arith.constant 0 : index
    %c0_28 = arith.constant 0 : index
    %38 = vector.load %arg11[%c0_27, %c0_28] : memref<1x128xf32, #tpu.memory_space<vmem>>, vector<1x128xf32>
    %cst_29 = arith.constant 0.000000e+00 : f32
    %39 = vector.broadcast %cst_29 : f32 to vector<1x128xf32>
    %40 = vector.extract_strided_slice %34 {offsets = [0, 0], sizes = [15, 128], strides = [1, 1]} : vector<16x128xf32> to vector<15x128xf32>
    %41 = tpu.concatenate %39, %40 in 0 : vector<1x128xf32>, vector<15x128xf32> -> vector<16x128xf32>
    %42 = vector.extract_strided_slice %34 {offsets = [1, 0], sizes = [15, 128], strides = [1, 1]} : vector<16x128xf32> to vector<15x128xf32>
    %cst_30 = arith.constant 0.000000e+00 : f32
    %43 = vector.broadcast %cst_30 : f32 to vector<1x128xf32>
    %44 = tpu.concatenate %42, %43 in 0 : vector<15x128xf32>, vector<1x128xf32> -> vector<16x128xf32>
    %45 = tpu.concatenate %41, %44 in 1 : vector<16x128xf32>, vector<16x128xf32> -> vector<16x256xf32>
    %46 = arith.truncf %45 : vector<16x256xf32> to vector<16x256xbf16>
    %cst_31 = arith.constant dense<0.000000e+00> : vector<16x128xf32>
    %47 = tpu.matmul %46, %35, %cst_31 {dimension_numbers = #tpu.dot_dimension_numbers<[1], [0], [0], [1], [0, 0, 1, 1], [], []>} : vector<16x256xbf16>, vector<256x128xbf16>, vector<16x128xf32> -> vector<16x128xf32>
    %48 = vector.broadcast %36 : vector<1x128xf32> to vector<16x128xf32>
    %49 = arith.addf %47, %48 : vector<16x128xf32>
    %cst_32 = arith.constant 0.000000e+00 : f32
    %50 = vector.broadcast %cst_32 : f32 to vector<16x128xf32>
    %51 = arith.maximumf %49, %50 : vector<16x128xf32>
    %cst_33 = arith.constant 0.000000e+00 : f32
    %52 = vector.broadcast %cst_33 : f32 to vector<1x128xf32>
    %53 = vector.extract_strided_slice %51 {offsets = [0, 0], sizes = [15, 128], strides = [1, 1]} : vector<16x128xf32> to vector<15x128xf32>
    %54 = tpu.concatenate %52, %53 in 0 : vector<1x128xf32>, vector<15x128xf32> -> vector<16x128xf32>
    %55 = vector.extract_strided_slice %51 {offsets = [1, 0], sizes = [15, 128], strides = [1, 1]} : vector<16x128xf32> to vector<15x128xf32>
    %cst_34 = arith.constant 0.000000e+00 : f32
    %56 = vector.broadcast %cst_34 : f32 to vector<1x128xf32>
    %57 = tpu.concatenate %55, %56 in 0 : vector<15x128xf32>, vector<1x128xf32> -> vector<16x128xf32>
    %58 = tpu.concatenate %54, %57 in 1 : vector<16x128xf32>, vector<16x128xf32> -> vector<16x256xf32>
    %59 = arith.truncf %58 : vector<16x256xf32> to vector<16x256xbf16>
    %cst_35 = arith.constant dense<0.000000e+00> : vector<16x128xf32>
    %60 = tpu.matmul %59, %37, %cst_35 {dimension_numbers = #tpu.dot_dimension_numbers<[1], [0], [0], [1], [0, 0, 1, 1], [], []>} : vector<16x256xbf16>, vector<256x128xbf16>, vector<16x128xf32> -> vector<16x128xf32>
    %61 = vector.broadcast %38 : vector<1x128xf32> to vector<16x128xf32>
    %62 = arith.addf %60, %61 : vector<16x128xf32>
    %cst_36 = arith.constant 0.000000e+00 : f32
    %63 = vector.broadcast %cst_36 : f32 to vector<16x128xf32>
    %64 = arith.maximumf %62, %63 : vector<16x128xf32>
    %65 = arith.addf %64, %34 : vector<16x128xf32>
    %cst_37 = arith.constant 0.000000e+00 : f32
    %66 = vector.broadcast %cst_37 : f32 to vector<16x128xf32>
    %67 = arith.maximumf %65, %66 : vector<16x128xf32>
    %c0_38 = arith.constant 0 : index
    %c0_39 = arith.constant 0 : index
    %68 = vector.load %arg12[%c0_38, %c0_39] : memref<256x128xbf16, #tpu.memory_space<vmem>>, vector<256x128xbf16>
    %c0_40 = arith.constant 0 : index
    %c0_41 = arith.constant 0 : index
    %69 = vector.load %arg13[%c0_40, %c0_41] : memref<1x128xf32, #tpu.memory_space<vmem>>, vector<1x128xf32>
    %c0_42 = arith.constant 0 : index
    %c0_43 = arith.constant 0 : index
    %70 = vector.load %arg14[%c0_42, %c0_43] : memref<256x128xbf16, #tpu.memory_space<vmem>>, vector<256x128xbf16>
    %c0_44 = arith.constant 0 : index
    %c0_45 = arith.constant 0 : index
    %71 = vector.load %arg15[%c0_44, %c0_45] : memref<1x128xf32, #tpu.memory_space<vmem>>, vector<1x128xf32>
    %c0_46 = arith.constant 0 : index
    %c0_47 = arith.constant 0 : index
    %72 = vector.load %arg16[%c0_46, %c0_47] : memref<128x128xbf16, #tpu.memory_space<vmem>>, vector<128x128xbf16>
    %c0_48 = arith.constant 0 : index
    %c0_49 = arith.constant 0 : index
    %73 = vector.load %arg17[%c0_48, %c0_49] : memref<1x128xf32, #tpu.memory_space<vmem>>, vector<1x128xf32>
    %cst_50 = arith.constant 0.000000e+00 : f32
    %74 = vector.broadcast %cst_50 : f32 to vector<2x128xf32>
    %75 = vector.extract_strided_slice %67 {offsets = [0, 0], sizes = [14, 128], strides = [1, 1]} : vector<16x128xf32> to vector<14x128xf32>
    %76 = tpu.concatenate %74, %75 in 0 : vector<2x128xf32>, vector<14x128xf32> -> vector<16x128xf32>
    %77 = vector.extract_strided_slice %67 {offsets = [2, 0], sizes = [14, 128], strides = [1, 1]} : vector<16x128xf32> to vector<14x128xf32>
    %cst_51 = arith.constant 0.000000e+00 : f32
    %78 = vector.broadcast %cst_51 : f32 to vector<2x128xf32>
    %79 = tpu.concatenate %77, %78 in 0 : vector<14x128xf32>, vector<2x128xf32> -> vector<16x128xf32>
    %80 = tpu.concatenate %76, %79 in 1 : vector<16x128xf32>, vector<16x128xf32> -> vector<16x256xf32>
    %81 = arith.truncf %80 : vector<16x256xf32> to vector<16x256xbf16>
    %cst_52 = arith.constant dense<0.000000e+00> : vector<16x128xf32>
    %82 = tpu.matmul %81, %68, %cst_52 {dimension_numbers = #tpu.dot_dimension_numbers<[1], [0], [0], [1], [0, 0, 1, 1], [], []>} : vector<16x256xbf16>, vector<256x128xbf16>, vector<16x128xf32> -> vector<16x128xf32>
    %83 = vector.broadcast %69 : vector<1x128xf32> to vector<16x128xf32>
    %84 = arith.addf %82, %83 : vector<16x128xf32>
    %cst_53 = arith.constant 0.000000e+00 : f32
    %85 = vector.broadcast %cst_53 : f32 to vector<16x128xf32>
    %86 = arith.maximumf %84, %85 : vector<16x128xf32>
    %cst_54 = arith.constant 0.000000e+00 : f32
    %87 = vector.broadcast %cst_54 : f32 to vector<2x128xf32>
    %88 = vector.extract_strided_slice %86 {offsets = [0, 0], sizes = [14, 128], strides = [1, 1]} : vector<16x128xf32> to vector<14x128xf32>
    %89 = tpu.concatenate %87, %88 in 0 : vector<2x128xf32>, vector<14x128xf32> -> vector<16x128xf32>
    %90 = vector.extract_strided_slice %86 {offsets = [2, 0], sizes = [14, 128], strides = [1, 1]} : vector<16x128xf32> to vector<14x128xf32>
    %cst_55 = arith.constant 0.000000e+00 : f32
    %91 = vector.broadcast %cst_55 : f32 to vector<2x128xf32>
    %92 = tpu.concatenate %90, %91 in 0 : vector<14x128xf32>, vector<2x128xf32> -> vector<16x128xf32>
    %93 = tpu.concatenate %89, %92 in 1 : vector<16x128xf32>, vector<16x128xf32> -> vector<16x256xf32>
    %94 = arith.truncf %93 : vector<16x256xf32> to vector<16x256xbf16>
    %cst_56 = arith.constant dense<0.000000e+00> : vector<16x128xf32>
    %95 = tpu.matmul %94, %70, %cst_56 {dimension_numbers = #tpu.dot_dimension_numbers<[1], [0], [0], [1], [0, 0, 1, 1], [], []>} : vector<16x256xbf16>, vector<256x128xbf16>, vector<16x128xf32> -> vector<16x128xf32>
    %96 = vector.broadcast %71 : vector<1x128xf32> to vector<16x128xf32>
    %97 = arith.addf %95, %96 : vector<16x128xf32>
    %cst_57 = arith.constant 0.000000e+00 : f32
    %98 = vector.broadcast %cst_57 : f32 to vector<16x128xf32>
    %99 = arith.maximumf %97, %98 : vector<16x128xf32>
    %100 = arith.truncf %67 : vector<16x128xf32> to vector<16x128xbf16>
    %cst_58 = arith.constant dense<0.000000e+00> : vector<16x128xf32>
    %101 = tpu.matmul %100, %72, %cst_58 {dimension_numbers = #tpu.dot_dimension_numbers<[1], [0], [0], [1], [0, 0, 1, 1], [], []>} : vector<16x128xbf16>, vector<128x128xbf16>, vector<16x128xf32> -> vector<16x128xf32>
    %102 = vector.broadcast %73 : vector<1x128xf32> to vector<16x128xf32>
    %103 = arith.addf %101, %102 : vector<16x128xf32>
    %104 = arith.addf %99, %103 : vector<16x128xf32>
    %cst_59 = arith.constant 0.000000e+00 : f32
    %105 = vector.broadcast %cst_59 : f32 to vector<16x128xf32>
    %106 = arith.maximumf %104, %105 : vector<16x128xf32>
    %c0_60 = arith.constant 0 : index
    %c0_61 = arith.constant 0 : index
    %c0_62 = arith.constant 0 : index
    %107 = vector.load %arg18[%c0_60, %c0_61, %c0_62] : memref<1x16x128xf32, #tpu.memory_space<vmem>>, vector<1x16x128xf32>
    %108 = vector.shape_cast %107 : vector<1x16x128xf32> to vector<16x128xf32>
    %109 = vector.shape_cast %106 : vector<16x128xf32> to vector<1x16x128xf32>
    tpu.vector_store %arg18[%c0_60, %c0_61, %c0_62], %109 {strides = array<i32>} : memref<1x16x128xf32, #tpu.memory_space<vmem>>, vector<1x16x128xf32>,
    return
  }
  func.func @transform_0(%arg0: i32) -> (i32, i32, i32) {
    %c0_i32 = arith.constant 0 : i32
    %c0_i32_0 = arith.constant 0 : i32
    %c0_i32_1 = arith.constant 0 : i32
    return %arg0, %c0_i32, %c0_i32_0 : i32, i32, i32
  }
  func.func @transform_1(%arg0: i32) -> (i32, i32) {
    %c0_i32 = arith.constant 0 : i32
    %c0_i32_0 = arith.constant 0 : i32
    %c0_i32_1 = arith.constant 0 : i32
    return %c0_i32, %c0_i32_0 : i32, i32
  }
  func.func @transform_2(%arg0: i32) -> (i32, i32) {
    %c0_i32 = arith.constant 0 : i32
    %c0_i32_0 = arith.constant 0 : i32
    %c0_i32_1 = arith.constant 0 : i32
    return %c0_i32, %c0_i32_0 : i32, i32
  }
  func.func @transform_3(%arg0: i32) -> (i32, i32) {
    %c0_i32 = arith.constant 0 : i32
    %c0_i32_0 = arith.constant 0 : i32
    %c0_i32_1 = arith.constant 0 : i32
    return %c0_i32, %c0_i32_0 : i32, i32
  }
  func.func @transform_4(%arg0: i32) -> (i32, i32) {
    %c0_i32 = arith.constant 0 : i32
    %c0_i32_0 = arith.constant 0 : i32
    %c0_i32_1 = arith.constant 0 : i32
    return %c0_i32, %c0_i32_0 : i32, i32
  }
  func.func @transform_5(%arg0: i32) -> (i32, i32) {
    %c0_i32 = arith.constant 0 : i32
    %c0_i32_0 = arith.constant 0 : i32
    %c0_i32_1 = arith.constant 0 : i32
    return %c0_i32, %c0_i32_0 : i32, i32
  }
  func.func @transform_6(%arg0: i32) -> (i32, i32) {
    %c0_i32 = arith.constant 0 : i32
    %c0_i32_0 = arith.constant 0 : i32
    %c0_i32_1 = arith.constant 0 : i32
    return %c0_i32, %c0_i32_0 : i32, i32
  }
  func.func @transform_7(%arg0: i32) -> (i32, i32) {
    %c0_i32 = arith.constant 0 : i32
    %c0_i32_0 = arith.constant 0 : i32
    %c0_i32_1 = arith.constant 0 : i32
    return %c0_i32, %c0_i32_0 : i32, i32
  }
  func.func @transform_8(%arg0: i32) -> (i32, i32) {
    %c0_i32 = arith.constant 0 : i32
    %c0_i32_0 = arith.constant 0 : i32
    %c0_i32_1 = arith.constant 0 : i32
    return %c0_i32, %c0_i32_0 : i32, i32
  }
  func.func @transform_9(%arg0: i32) -> (i32, i32) {
    %c0_i32 = arith.constant 0 : i32
    %c0_i32_0 = arith.constant 0 : i32
    %c0_i32_1 = arith.constant 0 : i32
    return %c0_i32, %c0_i32_0 : i32, i32
  }
  func.func @transform_10(%arg0: i32) -> (i32, i32) {
    %c0_i32 = arith.constant 0 : i32
    %c0_i32_0 = arith.constant 0 : i32
    %c0_i32_1 = arith.constant 0 : i32
    return %c0_i32, %c0_i32_0 : i32, i32
  }
  func.func @transform_11(%arg0: i32) -> (i32, i32) {
    %c0_i32 = arith.constant 0 : i32
    %c0_i32_0 = arith.constant 0 : i32
    %c0_i32_1 = arith.constant 0 : i32
    return %c0_i32, %c0_i32_0 : i32, i32
  }
  func.func @transform_12(%arg0: i32) -> (i32, i32) {
    %c0_i32 = arith.constant 0 : i32
    %c0_i32_0 = arith.constant 0 : i32
    %c0_i32_1 = arith.constant 0 : i32
    return %c0_i32, %c0_i32_0 : i32, i32
  }
  func.func @transform_13(%arg0: i32) -> (i32, i32) {
    %c0_i32 = arith.constant 0 : i32
    %c0_i32_0 = arith.constant 0 : i32
    %c0_i32_1 = arith.constant 0 : i32
    return %c0_i32, %c0_i32_0 : i32, i32
  }
  func.func @transform_14(%arg0: i32) -> (i32, i32) {
    %c0_i32 = arith.constant 0 : i32
    %c0_i32_0 = arith.constant 0 : i32
    %c0_i32_1 = arith.constant 0 : i32
    return %c0_i32, %c0_i32_0 : i32, i32
  }
  func.func @transform_15(%arg0: i32) -> (i32, i32) {
    %c0_i32 = arith.constant 0 : i32
    %c0_i32_0 = arith.constant 0 : i32
    %c0_i32_1 = arith.constant 0 : i32
    return %c0_i32, %c0_i32_0 : i32, i32
  }
  func.func @transform_16(%arg0: i32) -> (i32, i32) {
    %c0_i32 = arith.constant 0 : i32
    %c0_i32_0 = arith.constant 0 : i32
    %c0_i32_1 = arith.constant 0 : i32
    return %c0_i32, %c0_i32_0 : i32, i32
  }
  func.func @transform_17(%arg0: i32) -> (i32, i32, i32) {
    %c0_i32 = arith.constant 0 : i32
    %c0_i32_0 = arith.constant 0 : i32
    %c0_i32_1 = arith.constant 0 : i32
    return %arg0, %c0_i32, %c0_i32_0 : i32, i32, i32
  }
}

</mosaic_0001>

<llo_original>
// kernel: temporal_conv_net.1
$region0: #{temporal_conv_net.1}
  #allocation0 [shape = 'u32[]', space=smem, size = 0x4, offset = 0x4, fixed_abs, tag = 'smem constant byte address 0x4 - core index']
  #allocation1 [shape = 'u32[144,128]{1,0:T(1,128)}', space=vmem, size = 0x12000, scoped, tag = 'internal scratch']
  %s0 = inlined_call_operand.vmem [shape: f32[2,16,128], index: 0, kind: input, shape index: {}]
  %s1 = inlined_call_operand.vmem [shape: bf16[256,128], index: 1, kind: input, shape index: {}]
  %s2 = inlined_call_operand.vmem [shape: f32[1,128], index: 2, kind: input, shape index: {}]
  %s3 = inlined_call_operand.vmem [shape: bf16[256,128], index: 3, kind: input, shape index: {}]
  %s4 = inlined_call_operand.vmem [shape: f32[1,128], index: 4, kind: input, shape index: {}]
  %s5 = inlined_call_operand.vmem [shape: bf16[128,128], index: 5, kind: input, shape index: {}]
  %s6 = inlined_call_operand.vmem [shape: f32[1,128], index: 6, kind: input, shape index: {}]
  %s7 = inlined_call_operand.vmem [shape: bf16[256,128], index: 7, kind: input, shape index: {}]
  %s8 = inlined_call_operand.vmem [shape: f32[1,128], index: 8, kind: input, shape index: {}]
  %s9 = inlined_call_operand.vmem [shape: bf16[256,128], index: 9, kind: input, shape index: {}]
  %s10 = inlined_call_operand.vmem [shape: f32[1,128], index: 10, kind: input, shape index: {}]
  %s11 = inlined_call_operand.vmem [shape: bf16[256,128], index: 11, kind: input, shape index: {}]
  %s12 = inlined_call_operand.vmem [shape: f32[1,128], index: 12, kind: input, shape index: {}]
  %s13 = inlined_call_operand.vmem [shape: bf16[256,128], index: 13, kind: input, shape index: {}]
  %s14 = inlined_call_operand.vmem [shape: f32[1,128], index: 14, kind: input, shape index: {}]
  %s15 = inlined_call_operand.vmem [shape: bf16[128,128], index: 15, kind: input, shape index: {}]
  %s16 = inlined_call_operand.vmem [shape: f32[1,128], index: 16, kind: input, shape index: {}]
  %s17 = inlined_call_operand.vmem [shape: f32[2,16,128], index: 17, kind: output, shape index: {}]
  %s18 = sld [smem:[#allocation0]]
  $region101: #{temporal_conv_net.1} parent=0
    _
  %s20 = ssub.s32 1, %s18
  %s21 = scalar_select 0, %s20, %s18
  loop: start=0, step=1, limit=4
  $region2: #{temporal_conv_net.1} parent=0 // loop_pre_header
    _
  $region3: #{temporal_conv_net.1} parent=0 // loop_header
    %s23 = sphi 0, %s27
    %p24 = scmp.ge.s32.totalorder %s23, 4
    %s33 = sphi 0, %s35
    %s36 = sphi 0, %s33
    %s37 = sphi 0, %s36
    %s53 = sphi 0, %s37
    %s57 = sphi 0, %s57
    %s59 = sphi 0, %s57
    %s60 = sphi 0, %s59
    %s74 = sphi 0, %s60
    %s78 = sphi 0, %s78
    %s80 = sphi 0, %s78
    %s81 = sphi 0, %s80
    %s95 = sphi 0, %s81
    %s99 = sphi 0, %s99
    %s101 = sphi 0, %s99
    %s102 = sphi 0, %s101
    %s116 = sphi 0, %s102
    %s120 = sphi 0, %s120
    %s122 = sphi 0, %s120
    %s123 = sphi 0, %s122
    %s137 = sphi 0, %s123
    %s141 = sphi 0, %s141
    %s143 = sphi 0, %s141
    %s144 = sphi 0, %s143
    %s158 = sphi 0, %s144
    %s162 = sphi 0, %s162
    %s164 = sphi 0, %s162
    %s165 = sphi 0, %s164
    %s179 = sphi 0, %s165
    %s183 = sphi 0, %s183
    %s185 = sphi 0, %s183
    %s186 = sphi 0, %s185
    %s200 = sphi 0, %s186
    %s204 = sphi 0, %s204
    %s206 = sphi 0, %s204
    %s207 = sphi 0, %s206
    %s221 = sphi 0, %s207
    %s225 = sphi 0, %s225
    %s227 = sphi 0, %s225
    %s228 = sphi 0, %s227
    %s242 = sphi 0, %s228
    %s246 = sphi 0, %s246
    %s248 = sphi 0, %s246
    %s249 = sphi 0, %s248
    %s263 = sphi 0, %s249
    %s267 = sphi 0, %s267
    %s269 = sphi 0, %s267
    %s270 = sphi 0, %s269
    %s284 = sphi 0, %s270
    %s288 = sphi 0, %s288
    %s290 = sphi 0, %s288
    %s291 = sphi 0, %s290
    %s305 = sphi 0, %s291
    %s309 = sphi 0, %s309
    %s311 = sphi 0, %s309
    %s312 = sphi 0, %s311
    %s326 = sphi 0, %s312
    %s330 = sphi 0, %s330
    %s332 = sphi 0, %s330
    %s333 = sphi 0, %s332
    %s347 = sphi 0, %s333
    %s351 = sphi 0, %s351
    %s353 = sphi 0, %s351
    %s354 = sphi 0, %s353
    %s368 = sphi 0, %s354
    %s372 = sphi 0, %s372
    %s374 = sphi 0, %s372
    %s375 = sphi 0, %s374
    %s389 = sphi 0, %s375
    %s395 = sphi 0, %s397
    %s398 = sphi 0, %s395
    %s399 = sphi 0, %s398
    %s415 = sphi 0, %s399
  $region4: #{temporal_conv_net.1} parent=0 // loop_header_branch
    %26 = sbr.rel (%p24) target = $region8
  $region5: #{temporal_conv_net.1} parent=0 // loop_body
    %s28 = ssub.s32 %s23, 1
    %s29 = ssub.s32 %s23, 2
    %s30 = sadd.s32 %s23, 1
    %s31 = ssub.s32 %s23, %s30
    %p32 = scmp.eq.s32.totalorder %s31, 0
    %s34 = sadd.s32 %s33, 1
    %s35 = scalar_select %p32, %s33, %s34
    %p38 = pneg %p32
    %p39 = scmp.eq.s32.totalorder %s23, 1
    %p40 = por %p38, %p39
    %p41 = scmp.ne.s32.totalorder %s33, %s36
    %p42 = scmp.eq.s32.totalorder %s23, 0
    %p43 = por %p41, %p42
    %p44 = scmp.ne.s32.totalorder %s33, %s36
    %p45 = scmp.eq.s32.totalorder %s28, 1
    %p46 = por %p44, %p45
    %p47 = scmp.ne.s32.totalorder %s36, %s37
    %p48 = scmp.eq.s32.totalorder %s28, 0
    %p49 = por %p47, %p48
    %p50 = scmp.ne.s32.totalorder %s36, %s37
    %p51 = scmp.eq.s32.totalorder %s29, 1
    %p52 = por %p50, %p51
    %p54 = scmp.ne.s32.totalorder %s37, %s53
    %p55 = scmp.eq.s32.totalorder %s29, 0
    %p56 = por %p54, %p55
    %s58 = sadd.s32 %s57, 1
    %p61 = scmp.eq.s32.totalorder %s23, 1
    %p62 = scmp.ne.s32.totalorder %s57, %s59
    %p63 = scmp.eq.s32.totalorder %s23, 0
    %p64 = por %p62, %p63
    %p65 = scmp.ne.s32.totalorder %s57, %s59
    %p66 = scmp.eq.s32.totalorder %s28, 1
    %p67 = por %p65, %p66
    %p68 = scmp.ne.s32.totalorder %s59, %s60
    %p69 = scmp.eq.s32.totalorder %s28, 0
    %p70 = por %p68, %p69
    %p71 = scmp.ne.s32.totalorder %s59, %s60
    %p72 = scmp.eq.s32.totalorder %s29, 1
    %p73 = por %p71, %p72
    %p75 = scmp.ne.s32.totalorder %s60, %s74
    %p76 = scmp.eq.s32.totalorder %s29, 0
    %p77 = por %p75, %p76
    %s79 = sadd.s32 %s78, 1
    %p82 = scmp.eq.s32.totalorder %s23, 1
    %p83 = scmp.ne.s32.totalorder %s78, %s80
    %p84 = scmp.eq.s32.totalorder %s23, 0
    %p85 = por %p83, %p84
    %p86 = scmp.ne.s32.totalorder %s78, %s80
    %p87 = scmp.eq.s32.totalorder %s28, 1
    %p88 = por %p86, %p87
    %p89 = scmp.ne.s32.totalorder %s80, %s81
    %p90 = scmp.eq.s32.totalorder %s28, 0
    %p91 = por %p89, %p90
    %p92 = scmp.ne.s32.totalorder %s80, %s81
    %p93 = scmp.eq.s32.totalorder %s29, 1
    %p94 = por %p92, %p93
    %p96 = scmp.ne.s32.totalorder %s81, %s95
    %p97 = scmp.eq.s32.totalorder %s29, 0
    %p98 = por %p96, %p97
    %s100 = sadd.s32 %s99, 1
    %p103 = scmp.eq.s32.totalorder %s23, 1
    %p104 = scmp.ne.s32.totalorder %s99, %s101
    %p105 = scmp.eq.s32.totalorder %s23, 0
    %p106 = por %p104, %p105
    %p107 = scmp.ne.s32.totalorder %s99, %s101
    %p108 = scmp.eq.s32.totalorder %s28, 1
    %p109 = por %p107, %p108
    %p110 = scmp.ne.s32.totalorder %s101, %s102
    %p111 = scmp.eq.s32.totalorder %s28, 0
    %p112 = por %p110, %p111
    %p113 = scmp.ne.s32.totalorder %s101, %s102
    %p114 = scmp.eq.s32.totalorder %s29, 1
    %p115 = por %p113, %p114
    %p117 = scmp.ne.s32.totalorder %s102, %s116
    %p118 = scmp.eq.s32.totalorder %s29, 0
    %p119 = por %p117, %p118
    %s121 = sadd.s32 %s120, 1
    %p124 = scmp.eq.s32.totalorder %s23, 1
    %p125 = scmp.ne.s32.totalorder %s120, %s122
    %p126 = scmp.eq.s32.totalorder %s23, 0
    %p127 = por %p125, %p126
    %p128 = scmp.ne.s32.totalorder %s120, %s122
    %p129 = scmp.eq.s32.totalorder %s28, 1
    %p130 = por %p128, %p129
    %p131 = scmp.ne.s32.totalorder %s122, %s123
    %p132 = scmp.eq.s32.totalorder %s28, 0
    %p133 = por %p131, %p132
    %p134 = scmp.ne.s32.totalorder %s122, %s123
    %p135 = scmp.eq.s32.totalorder %s29, 1
    %p136 = por %p134, %p135
    %p138 = scmp.ne.s32.totalorder %s123, %s137
    %p139 = scmp.eq.s32.totalorder %s29, 0
    %p140 = por %p138, %p139
    %s142 = sadd.s32 %s141, 1
    %p145 = scmp.eq.s32.totalorder %s23, 1
    %p146 = scmp.ne.s32.totalorder %s141, %s143
    %p147 = scmp.eq.s32.totalorder %s23, 0
    %p148 = por %p146, %p147
    %p149 = scmp.ne.s32.totalorder %s141, %s143
    %p150 = scmp.eq.s32.totalorder %s28, 1
    %p151 = por %p149, %p150
    %p152 = scmp.ne.s32.totalorder %s143, %s144
    %p153 = scmp.eq.s32.totalorder %s28, 0
    %p154 = por %p152, %p153
    %p155 = scmp.ne.s32.totalorder %s143, %s144
    %p156 = scmp.eq.s32.totalorder %s29, 1
    %p157 = por %p155, %p156
    %p159 = scmp.ne.s32.totalorder %s144, %s158
    %p160 = scmp.eq.s32.totalorder %s29, 0
    %p161 = por %p159, %p160
    %s163 = sadd.s32 %s162, 1
    %p166 = scmp.eq.s32.totalorder %s23, 1
    %p167 = scmp.ne.s32.totalorder %s162, %s164
    %p168 = scmp.eq.s32.totalorder %s23, 0
    %p169 = por %p167, %p168
    %p170 = scmp.ne.s32.totalorder %s162, %s164
    %p171 = scmp.eq.s32.totalorder %s28, 1
    %p172 = por %p170, %p171
    %p173 = scmp.ne.s32.totalorder %s164, %s165
    %p174 = scmp.eq.s32.totalorder %s28, 0
    %p175 = por %p173, %p174
    %p176 = scmp.ne.s32.totalorder %s164, %s165
    %p177 = scmp.eq.s32.totalorder %s29, 1
    %p178 = por %p176, %p177
    %p180 = scmp.ne.s32.totalorder %s165, %s179
    %p181 = scmp.eq.s32.totalorder %s29, 0
    %p182 = por %p180, %p181
    %s184 = sadd.s32 %s183, 1
    %p187 = scmp.eq.s32.totalorder %s23, 1
    %p188 = scmp.ne.s32.totalorder %s183, %s185
    %p189 = scmp.eq.s32.totalorder %s23, 0
    %p190 = por %p188, %p189
    %p191 = scmp.ne.s32.totalorder %s183, %s185
    %p192 = scmp.eq.s32.totalorder %s28, 1
    %p193 = por %p191, %p192
    %p194 = scmp.ne.s32.totalorder %s185, %s186
    %p195 = scmp.eq.s32.totalorder %s28, 0
    %p196 = por %p194, %p195
    %p197 = scmp.ne.s32.totalorder %s185, %s186
    %p198 = scmp.eq.s32.totalorder %s29, 1
    %p199 = por %p197, %p198
    %p201 = scmp.ne.s32.totalorder %s186, %s200
    %p202 = scmp.eq.s32.totalorder %s29, 0
    %p203 = por %p201, %p202
    %s205 = sadd.s32 %s204, 1
    %p208 = scmp.eq.s32.totalorder %s23, 1
    %p209 = scmp.ne.s32.totalorder %s204, %s206
    %p210 = scmp.eq.s32.totalorder %s23, 0
    %p211 = por %p209, %p210
    %p212 = scmp.ne.s32.totalorder %s204, %s206
    %p213 = scmp.eq.s32.totalorder %s28, 1
    %p214 = por %p212, %p213
    %p215 = scmp.ne.s32.totalorder %s206, %s207
    %p216 = scmp.eq.s32.totalorder %s28, 0
    %p217 = por %p215, %p216
    %p218 = scmp.ne.s32.totalorder %s206, %s207
    %p219 = scmp.eq.s32.totalorder %s29, 1
    %p220 = por %p218, %p219
    %p222 = scmp.ne.s32.totalorder %s207, %s221
    %p223 = scmp.eq.s32.totalorder %s29, 0
    %p224 = por %p222, %p223
    %s226 = sadd.s32 %s225, 1
    %p229 = scmp.eq.s32.totalorder %s23, 1
    %p230 = scmp.ne.s32.totalorder %s225, %s227
    %p231 = scmp.eq.s32.totalorder %s23, 0
    %p232 = por %p230, %p231
    %p233 = scmp.ne.s32.totalorder %s225, %s227
    %p234 = scmp.eq.s32.totalorder %s28, 1
    %p235 = por %p233, %p234
    %p236 = scmp.ne.s32.totalorder %s227, %s228
    %p237 = scmp.eq.s32.totalorder %s28, 0
    %p238 = por %p236, %p237
    %p239 = scmp.ne.s32.totalorder %s227, %s228
    %p240 = scmp.eq.s32.totalorder %s29, 1
    %p241 = por %p239, %p240
    %p243 = scmp.ne.s32.totalorder %s228, %s242
    %p244 = scmp.eq.s32.totalorder %s29, 0
    %p245 = por %p243, %p244
    %s247 = sadd.s32 %s246, 1
    %p250 = scmp.eq.s32.totalorder %s23, 1
    %p251 = scmp.ne.s32.totalorder %s246, %s248
    %p252 = scmp.eq.s32.totalorder %s23, 0
    %p253 = por %p251, %p252
    %p254 = scmp.ne.s32.totalorder %s246, %s248
    %p255 = scmp.eq.s32.totalorder %s28, 1
    %p256 = por %p254, %p255
    %p257 = scmp.ne.s32.totalorder %s248, %s249
    %p258 = scmp.eq.s32.totalorder %s28, 0
    %p259 = por %p257, %p258
    %p260 = scmp.ne.s32.totalorder %s248, %s249
    %p261 = scmp.eq.s32.totalorder %s29, 1
    %p262 = por %p260, %p261
    %p264 = scmp.ne.s32.totalorder %s249, %s263
    %p265 = scmp.eq.s32.totalorder %s29, 0
    %p266 = por %p264, %p265
    %s268 = sadd.s32 %s267, 1
    %p271 = scmp.eq.s32.totalorder %s23, 1
    %p272 = scmp.ne.s32.totalorder %s267, %s269
    %p273 = scmp.eq.s32.totalorder %s23, 0
    %p274 = por %p272, %p273
    %p275 = scmp.ne.s32.totalorder %s267, %s269
    %p276 = scmp.eq.s32.totalorder %s28, 1
    %p277 = por %p275, %p276
    %p278 = scmp.ne.s32.totalorder %s269, %s270
    %p279 = scmp.eq.s32.totalorder %s28, 0
    %p280 = por %p278, %p279
    %p281 = scmp.ne.s32.totalorder %s269, %s270
    %p282 = scmp.eq.s32.totalorder %s29, 1
    %p283 = por %p281, %p282
    %p285 = scmp.ne.s32.totalorder %s270, %s284
    %p286 = scmp.eq.s32.totalorder %s29, 0
    %p287 = por %p285, %p286
    %s289 = sadd.s32 %s288, 1
    %p292 = scmp.eq.s32.totalorder %s23, 1
    %p293 = scmp.ne.s32.totalorder %s288, %s290
    %p294 = scmp.eq.s32.totalorder %s23, 0
    %p295 = por %p293, %p294
    %p296 = scmp.ne.s32.totalorder %s288, %s290
    %p297 = scmp.eq.s32.totalorder %s28, 1
    %p298 = por %p296, %p297
    %p299 = scmp.ne.s32.totalorder %s290, %s291
    %p300 = scmp.eq.s32.totalorder %s28, 0
    %p301 = por %p299, %p300
    %p302 = scmp.ne.s32.totalorder %s290, %s291
    %p303 = scmp.eq.s32.totalorder %s29, 1
    %p304 = por %p302, %p303
    %p306 = scmp.ne.s32.totalorder %s291, %s305
    %p307 = scmp.eq.s32.totalorder %s29, 0
    %p308 = por %p306, %p307
    %s310 = sadd.s32 %s309, 1
    %p313 = scmp.eq.s32.totalorder %s23, 1
    %p314 = scmp.ne.s32.totalorder %s309, %s311
    %p315 = scmp.eq.s32.totalorder %s23, 0
    %p316 = por %p314, %p315
    %p317 = scmp.ne.s32.totalorder %s309, %s311
    %p318 = scmp.eq.s32.totalorder %s28, 1
    %p319 = por %p317, %p318
    %p320 = scmp.ne.s32.totalorder %s311, %s312
    %p321 = scmp.eq.s32.totalorder %s28, 0
    %p322 = por %p320, %p321
    %p323 = scmp.ne.s32.totalorder %s311, %s312
    %p324 = scmp.eq.s32.totalorder %s29, 1
    %p325 = por %p323, %p324
    %p327 = scmp.ne.s32.totalorder %s312, %s326
    %p328 = scmp.eq.s32.totalorder %s29, 0
    %p329 = por %p327, %p328
    %s331 = sadd.s32 %s330, 1
    %p334 = scmp.eq.s32.totalorder %s23, 1
    %p335 = scmp.ne.s32.totalorder %s330, %s332
    %p336 = scmp.eq.s32.totalorder %s23, 0
    %p337 = por %p335, %p336
    %p338 = scmp.ne.s32.totalorder %s330, %s332
    %p339 = scmp.eq.s32.totalorder %s28, 1
    %p340 = por %p338, %p339
    %p341 = scmp.ne.s32.totalorder %s332, %s333
    %p342 = scmp.eq.s32.totalorder %s28, 0
    %p343 = por %p341, %p342
    %p344 = scmp.ne.s32.totalorder %s332, %s333
    %p345 = scmp.eq.s32.totalorder %s29, 1
    %p346 = por %p344, %p345
    %p348 = scmp.ne.s32.totalorder %s333, %s347
    %p349 = scmp.eq.s32.totalorder %s29, 0
    %p350 = por %p348, %p349
    %s352 = sadd.s32 %s351, 1
    %p355 = scmp.eq.s32.totalorder %s23, 1
    %p356 = scmp.ne.s32.totalorder %s351, %s353
    %p357 = scmp.eq.s32.totalorder %s23, 0
    %p358 = por %p356, %p357
    %p359 = scmp.ne.s32.totalorder %s351, %s353
    %p360 = scmp.eq.s32.totalorder %s28, 1
    %p361 = por %p359, %p360
    %p362 = scmp.ne.s32.totalorder %s353, %s354
    %p363 = scmp.eq.s32.totalorder %s28, 0
    %p364 = por %p362, %p363
    %p365 = scmp.ne.s32.totalorder %s353, %s354
    %p366 = scmp.eq.s32.totalorder %s29, 1
    %p367 = por %p365, %p366
    %p369 = scmp.ne.s32.totalorder %s354, %s368
    %p370 = scmp.eq.s32.totalorder %s29, 0
    %p371 = por %p369, %p370
    %s373 = sadd.s32 %s372, 1
    %p376 = scmp.eq.s32.totalorder %s23, 1
    %p377 = scmp.ne.s32.totalorder %s372, %s374
    %p378 = scmp.eq.s32.totalorder %s23, 0
    %p379 = por %p377, %p378
    %p380 = scmp.ne.s32.totalorder %s372, %s374
    %p381 = scmp.eq.s32.totalorder %s28, 1
    %p382 = por %p380, %p381
    %p383 = scmp.ne.s32.totalorder %s374, %s375
    %p384 = scmp.eq.s32.totalorder %s28, 0
    %p385 = por %p383, %p384
    %p386 = scmp.ne.s32.totalorder %s374, %s375
    %p387 = scmp.eq.s32.totalorder %s29, 1
    %p388 = por %p386, %p387
    %p390 = scmp.ne.s32.totalorder %s375, %s389
    %p391 = scmp.eq.s32.totalorder %s29, 0
    %p392 = por %p390, %p391
    %s393 = ssub.s32 %s23, %s30
    %p394 = scmp.eq.s32.totalorder %s393, 0
    %s396 = sadd.s32 %s395, 1
    %s397 = scalar_select %p394, %s395, %s396
    %p400 = pneg %p394
    %p401 = scmp.eq.s32.totalorder %s23, 1
    %p402 = por %p400, %p401
    %p403 = scmp.ne.s32.totalorder %s395, %s398
    %p404 = scmp.eq.s32.totalorder %s23, 0
    %p405 = por %p403, %p404
    %p406 = scmp.ne.s32.totalorder %s395, %s398
    %p407 = scmp.eq.s32.totalorder %s28, 1
    %p408 = por %p406, %p407
    %p409 = scmp.ne.s32.totalorder %s398, %s399
    %p410 = scmp.eq.s32.totalorder %s28, 0
    %p411 = por %p409, %p410
    %p412 = scmp.ne.s32.totalorder %s398, %s399
    %p413 = scmp.eq.s32.totalorder %s29, 1
    %p414 = por %p412, %p413
    %p416 = scmp.ne.s32.totalorder %s399, %s415
    %p417 = scmp.eq.s32.totalorder %s29, 0
    %p418 = por %p416, %p417
    %p419 = scmp.le.s32.totalorder 1, %s23
    %p420 = scmp.lt.s32.totalorder %s23, 3
    %p421 = pnand %p419, %p420
    %p422 = pneg %p421
    // Predicated region
    $region9: #{temporal_conv_net.1} parent=5 // pred_check
      _
    $region10: #{temporal_conv_net.1} parent=5 // pred_check_branch
      %424 = sbr.rel (%p421) target = $region12
    $region11: #{temporal_conv_net.1} parent=5 // pred_region
      %s425 = ssub.s32 %s23, 1
      // Predicated region
      $region13: #{temporal_conv_net.1} parent=11 // pred_check
        %p426 = pneg %p70
      $region14: #{temporal_conv_net.1} parent=11 // pred_check_branch
        %428 = sbr.rel (%p426) target = $region16
      $region15: #{temporal_conv_net.1} parent=11 // pred_region
        _
      $region16: #{temporal_conv_net.1} parent=11 // pred_fallthru
        _
      // Predicated region
      $region17: #{temporal_conv_net.1} parent=11 // pred_check
        %p429 = pneg %p91
      $region18: #{temporal_conv_net.1} parent=11 // pred_check_branch
        %431 = sbr.rel (%p429) target = $region20
      $region19: #{temporal_conv_net.1} parent=11 // pred_region
        _
      $region20: #{temporal_conv_net.1} parent=11 // pred_fallthru
        _
      // Predicated region
      $region21: #{temporal_conv_net.1} parent=11 // pred_check
        %p432 = pneg %p112
      $region22: #{temporal_conv_net.1} parent=11 // pred_check_branch
        %434 = sbr.rel (%p432) target = $region24
      $region23: #{temporal_conv_net.1} parent=11 // pred_region
        _
      $region24: #{temporal_conv_net.1} parent=11 // pred_fallthru
        _
      // Predicated region
      $region25: #{temporal_conv_net.1} parent=11 // pred_check
        %p435 = pneg %p133
      $region26: #{temporal_conv_net.1} parent=11 // pred_check_branch
        %437 = sbr.rel (%p435) target = $region28
      $region27: #{temporal_conv_net.1} parent=11 // pred_region
        _
      $region28: #{temporal_conv_net.1} parent=11 // pred_fallthru
        _
      // Predicated region
      $region29: #{temporal_conv_net.1} parent=11 // pred_check
        %p438 = pneg %p154
      $region30: #{temporal_conv_net.1} parent=11 // pred_check_branch
        %440 = sbr.rel (%p438) target = $region32
      $region31: #{temporal_conv_net.1} parent=11 // pred_region
        _
      $region32: #{temporal_conv_net.1} parent=11 // pred_fallthru
        _
      // Predicated region
      $region33: #{temporal_conv_net.1} parent=11 // pred_check
        %p441 = pneg %p175
      $region34: #{temporal_conv_net.1} parent=11 // pred_check_branch
        %443 = sbr.rel (%p441) target = $region36
      $region35: #{temporal_conv_net.1} parent=11 // pred_region
        _
      $region36: #{temporal_conv_net.1} parent=11 // pred_fallthru
        _
      // Predicated region
      $region37: #{temporal_conv_net.1} parent=11 // pred_check
        %p444 = pneg %p196
      $region38: #{temporal_conv_net.1} parent=11 // pred_check_branch
        %446 = sbr.rel (%p444) target = $region40
      $region39: #{temporal_conv_net.1} parent=11 // pred_region
        _
      $region40: #{temporal_conv_net.1} parent=11 // pred_fallthru
        _
      // Predicated region
      $region41: #{temporal_conv_net.1} parent=11 // pred_check
        %p447 = pneg %p217
      $region42: #{temporal_conv_net.1} parent=11 // pred_check_branch
        %449 = sbr.rel (%p447) target = $region44
      $region43: #{temporal_conv_net.1} parent=11 // pred_region
        _
      $region44: #{temporal_conv_net.1} parent=11 // pred_fallthru
        _
      // Predicated region
      $region45: #{temporal_conv_net.1} parent=11 // pred_check
        %p450 = pneg %p238
      $region46: #{temporal_conv_net.1} parent=11 // pred_check_branch
        %452 = sbr.rel (%p450) target = $region48
      $region47: #{temporal_conv_net.1} parent=11 // pred_region
        _
      $region48: #{temporal_conv_net.1} parent=11 // pred_fallthru
        _
      // Predicated region
      $region49: #{temporal_conv_net.1} parent=11 // pred_check
        %p453 = pneg %p259
      $region50: #{temporal_conv_net.1} parent=11 // pred_check_branch
        %455 = sbr.rel (%p453) target = $region52
      $region51: #{temporal_conv_net.1} parent=11 // pred_region
        _
      $region52: #{temporal_conv_net.1} parent=11 // pred_fallthru
        _
      // Predicated region
      $region53: #{temporal_conv_net.1} parent=11 // pred_check
        %p456 = pneg %p280
      $region54: #{temporal_conv_net.1} parent=11 // pred_check_branch
        %458 = sbr.rel (%p456) target = $region56
      $region55: #{temporal_conv_net.1} parent=11 // pred_region
        _
      $region56: #{temporal_conv_net.1} parent=11 // pred_fallthru
        _
      // Predicated region
      $region57: #{temporal_conv_net.1} parent=11 // pred_check
        %p459 = pneg %p301
      $region58: #{temporal_conv_net.1} parent=11 // pred_check_branch
        %461 = sbr.rel (%p459) target = $region60
      $region59: #{temporal_conv_net.1} parent=11 // pred_region
        _
      $region60: #{temporal_conv_net.1} parent=11 // pred_fallthru
        _
      // Predicated region
      $region61: #{temporal_conv_net.1} parent=11 // pred_check
        %p462 = pneg %p322
      $region62: #{temporal_conv_net.1} parent=11 // pred_check_branch
        %464 = sbr.rel (%p462) target = $region64
      $region63: #{temporal_conv_net.1} parent=11 // pred_region
        _
      $region64: #{temporal_conv_net.1} parent=11 // pred_fallthru
        _
      // Predicated region
      $region65: #{temporal_conv_net.1} parent=11 // pred_check
        %p465 = pneg %p343
      $region66: #{temporal_conv_net.1} parent=11 // pred_check_branch
        %467 = sbr.rel (%p465) target = $region68
      $region67: #{temporal_conv_net.1} parent=11 // pred_region
        _
      $region68: #{temporal_conv_net.1} parent=11 // pred_fallthru
        _
      // Predicated region
      $region69: #{temporal_conv_net.1} parent=11 // pred_check
        %p468 = pneg %p364
      $region70: #{temporal_conv_net.1} parent=11 // pred_check_branch
        %470 = sbr.rel (%p468) target = $region72
      $region71: #{temporal_conv_net.1} parent=11 // pred_region
        _
      $region72: #{temporal_conv_net.1} parent=11 // pred_fallthru
        _
      // Predicated region
      $region73: #{temporal_conv_net.1} parent=11 // pred_check
        %p471 = pneg %p385
      $region74: #{temporal_conv_net.1} parent=11 // pred_check_branch
        %473 = sbr.rel (%p471) target = $region76
      $region75: #{temporal_conv_net.1} parent=11 // pred_region
        _
      $region76: #{temporal_conv_net.1} parent=11 // pred_fallthru
        _
    $region12: #{temporal_conv_net.1} parent=5 // pred_fallthru
      _
    %p474 = scmp.lt.s32.totalorder %s23, 2
    // Predicated region
    $region77: #{temporal_conv_net.1} parent=5 // pred_check
      %p475 = pneg %p474
    $region78: #{temporal_conv_net.1} parent=5 // pred_check_branch
      %477 = sbr.rel (%p475) target = $region80
    $region79: #{temporal_conv_net.1} parent=5 // pred_region
      // Predicated region
      $region81: #{temporal_conv_net.1} parent=79 // pred_check
        %p478 = pneg %p43
      $region82: #{temporal_conv_net.1} parent=79 // pred_check_branch
        %480 = sbr.rel (%p478) target = $region84
      $region83: #{temporal_conv_net.1} parent=79 // pred_region
        %p481 = scmp.lt.s32.totalorder %s23, 1
        %s482 = scalar_select %p481, %s23, 1
        %s483 = smul.addr %s482, 2
        %s484 = smul.addr %s483, 8
        %s485 = scalar_lea.vmem %s0, %s484
      $region84: #{temporal_conv_net.1} parent=79 // pred_fallthru
        _
    $region80: #{temporal_conv_net.1} parent=5 // pred_fallthru
      _
    %p486 = scmp.le.s32.totalorder 1, %s23
    %p487 = scmp.lt.s32.totalorder %s23, 3
    %p488 = pnand %p486, %p487
    %p489 = pneg %p488
    // Predicated region
    $region85: #{temporal_conv_net.1} parent=5 // pred_check
      _
    $region86: #{temporal_conv_net.1} parent=5 // pred_check_branch
      %491 = sbr.rel (%p488) target = $region88
    $region87: #{temporal_conv_net.1} parent=5 // pred_region
      %s492 = ssub.s32 %s23, 1
      %p493 = scmp.lt.s32.totalorder %s28, 1
      %s494 = scalar_select %p493, %s28, 1
      %s495 = smul.addr %s494, 2
      %s496 = smul.addr %s495, 8
      %s497 = scalar_lea.vmem %s0, %s496
      %p498 = pneg %p49
      %p499 = pneg %p46
      %p500 = pneg %p70
      %p501 = pneg %p67
      %p502 = pneg %p91
      %p503 = pneg %p88
      %p504 = pneg %p112
      %p505 = pneg %p109
      %p506 = pneg %p133
      %p507 = pneg %p130
      %p508 = pneg %p154
      %p509 = pneg %p151
      %p510 = pneg %p175
      %p511 = pneg %p172
      %p512 = pneg %p196
      %p513 = pneg %p193
      %p514 = pneg %p217
      %p515 = pneg %p214
      %p516 = pneg %p238
      %p517 = pneg %p235
      %p518 = pneg %p259
      %p519 = pneg %p256
      %p520 = pneg %p280
      %p521 = pneg %p277
      %p522 = pneg %p301
      %p523 = pneg %p298
      %p524 = pneg %p322
      %p525 = pneg %p319
      %p526 = pneg %p343
      %p527 = pneg %p340
      %p528 = pneg %p364
      %p529 = pneg %p361
      %p530 = pneg %p385
      %p531 = pneg %p382
      %p532 = pneg %p411
      %p533 = pneg %p408
      %p534 = scmp.lt.s32.totalorder %s28, 1
      %s535 = scalar_select %p534, %s28, 1
      %s536 = smul.addr %s535, 2
      %s537 = smul.addr %s536, 8
      %s538 = scalar_lea.vmem %s17, %s537
      %p539 = scmp.lt.s32.totalorder %s28, 1
      %s540 = scalar_select %p539, %s28, 1
      %s541 = smul.addr %s540, 2
      %s542 = smul.addr %s541, 8
      %s543 = scalar_lea.vmem %s0, %s542
      %p544 = scmp.lt.s32.totalorder %s28, 1
      %s545 = scalar_select %p544, %s28, 1
      %s546 = smul.addr %s545, 2
      %s547 = smul.addr %s546, 8
      %s548 = scalar_lea.vmem %s17, %s547
      %v550 = vld [vmem:[%s543] sm:$0xff]
      %v551 = vld [vmem:[%s543 + $0x8] sm:$0xff]
      %v552 = vld [vmem:[%s1] sm:$0xf]
      %v553 = vld [vmem:[%s1 + $0x4] sm:$0xf]
      %v554 = vld [vmem:[%s1 + $0x8] sm:$0xf]
      %v555 = vld [vmem:[%s1 + $0xc] sm:$0xf]
      %v556 = vld [vmem:[%s1 + $0x10] sm:$0xf]
      %v557 = vld [vmem:[%s1 + $0x14] sm:$0xf]
      %v558 = vld [vmem:[%s1 + $0x18] sm:$0xf]
      %v559 = vld [vmem:[%s1 + $0x1c] sm:$0xf]
      %v560 = vld [vmem:[%s1 + $0x20] sm:$0xf]
      %v561 = vld [vmem:[%s1 + $0x24] sm:$0xf]
      %v562 = vld [vmem:[%s1 + $0x28] sm:$0xf]
      %v563 = vld [vmem:[%s1 + $0x2c] sm:$0xf]
      %v564 = vld [vmem:[%s1 + $0x30] sm:$0xf]
      %v565 = vld [vmem:[%s1 + $0x34] sm:$0xf]
      %v566 = vld [vmem:[%s1 + $0x38] sm:$0xf]
      %v567 = vld [vmem:[%s1 + $0x3c] sm:$0xf]
      %v568 = vld [vmem:[%s1 + $0x40] sm:$0xf]
      %v569 = vld [vmem:[%s1 + $0x44] sm:$0xf]
      %v570 = vld [vmem:[%s1 + $0x48] sm:$0xf]
      %v571 = vld [vmem:[%s1 + $0x4c] sm:$0xf]
      %v572 = vld [vmem:[%s1 + $0x50] sm:$0xf]
      %v573 = vld [vmem:[%s1 + $0x54] sm:$0xf]
      %v574 = vld [vmem:[%s1 + $0x58] sm:$0xf]
      %v575 = vld [vmem:[%s1 + $0x5c] sm:$0xf]
      %v576 = vld [vmem:[%s1 + $0x60] sm:$0xf]
      %v577 = vld [vmem:[%s1 + $0x64] sm:$0xf]
      %v578 = vld [vmem:[%s1 + $0x68] sm:$0xf]
      %v579 = vld [vmem:[%s1 + $0x6c] sm:$0xf]
      %v580 = vld [vmem:[%s1 + $0x70] sm:$0xf]
      %v581 = vld [vmem:[%s1 + $0x74] sm:$0xf]
      %v582 = vld [vmem:[%s1 + $0x78] sm:$0xf]
      %v583 = vld [vmem:[%s1 + $0x7c] sm:$0xf]
      %v584 = vld [vmem:[%s2] sm:$0x1]
      %v585 = vld [vmem:[%s3] sm:$0xf]
      %v586 = vld [vmem:[%s3 + $0x4] sm:$0xf]
      %v587 = vld [vmem:[%s3 + $0x8] sm:$0xf]
      %v588 = vld [vmem:[%s3 + $0xc] sm:$0xf]
      %v589 = vld [vmem:[%s3 + $0x10] sm:$0xf]
      %v590 = vld [vmem:[%s3 + $0x14] sm:$0xf]
      %v591 = vld [vmem:[%s3 + $0x18] sm:$0xf]
      %v592 = vld [vmem:[%s3 + $0x1c] sm:$0xf]
      %v593 = vld [vmem:[%s3 + $0x20] sm:$0xf]
      %v594 = vld [vmem:[%s3 + $0x24] sm:$0xf]
      %v595 = vld [vmem:[%s3 + $0x28] sm:$0xf]
      %v596 = vld [vmem:[%s3 + $0x2c] sm:$0xf]
      %v597 = vld [vmem:[%s3 + $0x30] sm:$0xf]
      %v598 = vld [vmem:[%s3 + $0x34] sm:$0xf]
      %v599 = vld [vmem:[%s3 + $0x38] sm:$0xf]
      %v600 = vld [vmem:[%s3 + $0x3c] sm:$0xf]
      %v601 = vld [vmem:[%s3 + $0x40] sm:$0xf]
      %v602 = vld [vmem:[%s3 + $0x44] sm:$0xf]
      %v603 = vld [vmem:[%s3 + $0x48] sm:$0xf]
      %v604 = vld [vmem:[%s3 + $0x4c] sm:$0xf]
      %v605 = vld [vmem:[%s3 + $0x50] sm:$0xf]
      %v606 = vld [vmem:[%s3 + $0x54] sm:$0xf]
      %v607 = vld [vmem:[%s3 + $0x58] sm:$0xf]
      %v608 = vld [vmem:[%s3 + $0x5c] sm:$0xf]
      %v609 = vld [vmem:[%s3 + $0x60] sm:$0xf]
      %v610 = vld [vmem:[%s3 + $0x64] sm:$0xf]
      %v611 = vld [vmem:[%s3 + $0x68] sm:$0xf]
      %v612 = vld [vmem:[%s3 + $0x6c] sm:$0xf]
      %v613 = vld [vmem:[%s3 + $0x70] sm:$0xf]
      %v614 = vld [vmem:[%s3 + $0x74] sm:$0xf]
      %v615 = vld [vmem:[%s3 + $0x78] sm:$0xf]
      %v616 = vld [vmem:[%s3 + $0x7c] sm:$0xf]
      %v617 = vld [vmem:[%s4] sm:$0x1]
      %v618 = vld [vmem:[%s5] sm:$0xf]
      %v619 = vld [vmem:[%s5 + $0x4] sm:$0xf]
      %v620 = vld [vmem:[%s5 + $0x8] sm:$0xf]
      %v621 = vld [vmem:[%s5 + $0xc] sm:$0xf]
      %v622 = vld [vmem:[%s5 + $0x10] sm:$0xf]
      %v623 = vld [vmem:[%s5 + $0x14] sm:$0xf]
      %v624 = vld [vmem:[%s5 + $0x18] sm:$0xf]
      %v625 = vld [vmem:[%s5 + $0x1c] sm:$0xf]
      %v626 = vld [vmem:[%s5 + $0x20] sm:$0xf]
      %v627 = vld [vmem:[%s5 + $0x24] sm:$0xf]
      %v628 = vld [vmem:[%s5 + $0x28] sm:$0xf]
      %v629 = vld [vmem:[%s5 + $0x2c] sm:$0xf]
      %v630 = vld [vmem:[%s5 + $0x30] sm:$0xf]
      %v631 = vld [vmem:[%s5 + $0x34] sm:$0xf]
      %v632 = vld [vmem:[%s5 + $0x38] sm:$0xf]
      %v633 = vld [vmem:[%s5 + $0x3c] sm:$0xf]
      %v634 = vld [vmem:[%s6] sm:$0x1]
      %vm637 = vcmask 1040384
      %v638 = vrot.slane %v550, 7
      %v639 = vrot.slane %v551, 7
      %v640 = vsel %vm637, %v638, %v639
      %v643 = vsel %vm637, 0.0, %v638
      %v644 = vpack.c.bf16 %v640, %v643
      %v645 = vpack.c.bf16 %v551, %v550
      %v647 = vlaneseq
      %v648 = vshrl.u32 %v647, 7
      %v649 = vsub.s32 0, %v648
      %v650 = vrot.slane %v584, %v649
      %v684 = vunpack.c.l.b16 %v552
      %v685 = vunpack.c.l.b16 %v553
      %v686 = vunpack.c.l.b16 %v554
      %v687 = vunpack.c.l.b16 %v555
      %v688 = vunpack.c.l.b16 %v556
      %v689 = vunpack.c.l.b16 %v557
      %v690 = vunpack.c.l.b16 %v558
      %v691 = vunpack.c.l.b16 %v559
      %v692 = vunpack.c.l.b16 %v560
      %v693 = vunpack.c.l.b16 %v561
      %v694 = vunpack.c.l.b16 %v562
      %v695 = vunpack.c.l.b16 %v563
      %v696 = vunpack.c.l.b16 %v564
      %v697 = vunpack.c.l.b16 %v565
      %v698 = vunpack.c.l.b16 %v566
      %v699 = vunpack.c.l.b16 %v567
      %v700 = vunpack.c.l.b16 %v568
      %v701 = vunpack.c.l.b16 %v569
      %v702 = vunpack.c.l.b16 %v570
      %v703 = vunpack.c.l.b16 %v571
      %v704 = vunpack.c.l.b16 %v572
      %v705 = vunpack.c.l.b16 %v573
      %v706 = vunpack.c.l.b16 %v574
      %v707 = vunpack.c.l.b16 %v575
      %v708 = vunpack.c.l.b16 %v576
      %v709 = vunpack.c.l.b16 %v577
      %v710 = vunpack.c.l.b16 %v578
      %v711 = vunpack.c.l.b16 %v579
      %v712 = vunpack.c.l.b16 %v580
      %v713 = vunpack.c.l.b16 %v581
      %v714 = vunpack.c.l.b16 %v582
      %v715 = vunpack.c.l.b16 %v583
      %v716 = vpack.c.b16 %v685, %v684
      %v717 = vpack.c.b16 %v687, %v686
      %v718 = vpack.c.b16 %v689, %v688
      %v719 = vpack.c.b16 %v691, %v690
      %v720 = vpack.c.b16 %v693, %v692
      %v721 = vpack.c.b16 %v695, %v694
      %v722 = vpack.c.b16 %v697, %v696
      %v723 = vpack.c.b16 %v699, %v698
      %v724 = vpack.c.b16 %v701, %v700
      %v725 = vpack.c.b16 %v703, %v702
      %v726 = vpack.c.b16 %v705, %v704
      %v727 = vpack.c.b16 %v707, %v706
      %v728 = vpack.c.b16 %v709, %v708
      %v729 = vpack.c.b16 %v711, %v710
      %v730 = vpack.c.b16 %v713, %v712
      %v731 = vpack.c.b16 %v715, %v714
      %748 = vmatprep.subr.bf16.mxu0 0
      %749 = vmatpush1.bf16.msra.mxu0 %v723
      %750 = vmatprep.subr.bf16.mxu0 0
      %751 = vmatpush1.bf16.msra.mxu0 %v722
      %752 = vmatprep.subr.bf16.mxu0 0
      %753 = vmatpush1.bf16.msra.mxu0 %v721
      %754 = vmatprep.subr.bf16.mxu0 0
      %755 = vmatpush1.bf16.msra.mxu0 %v720
      %756 = vmatprep.subr.bf16.mxu0 0
      %757 = vmatpush1.bf16.msra.mxu0 %v719
      %758 = vmatprep.subr.bf16.mxu0 0
      %759 = vmatpush1.bf16.msra.mxu0 %v718
      %760 = vmatprep.subr.bf16.mxu0 0
      %761 = vmatpush1.bf16.msra.mxu0 %v717
      %762 = vmatprep.subr.bf16.mxu0 0
      %763 = vmatpush1.bf16.msra.mxu0 %v716
      %764 = vmatprep.subr.bf16.mxu0 0
      %765 = vmatpush2.bf16.msra.mxu0 %v731
      %766 = vmatprep.subr.bf16.mxu0 0
      %767 = vmatpush2.bf16.msra.mxu0 %v730
      %768 = vmatprep.subr.bf16.mxu0 0
      %769 = vmatpush2.bf16.msra.mxu0 %v729
      %770 = vmatprep.subr.bf16.mxu0 0
      %771 = vmatpush2.bf16.msra.mxu0 %v728
      %772 = vmatprep.subr.bf16.mxu0 0
      %773 = vmatpush2.bf16.msra.mxu0 %v727
      %774 = vmatprep.subr.bf16.mxu0 0
      %775 = vmatpush2.bf16.msra.mxu0 %v726
      %776 = vmatprep.subr.bf16.mxu0 0
      %777 = vmatpush2.bf16.msra.mxu0 %v725
      %778 = vmatprep.subr.bf16.mxu0 0
      %779 = vmatpush2.bf16.msra.mxu0 %v724
      %780 = vmatprep.mubr.bf16.mxu0 %v645
      %781 = vmatmul.mubr.bf16.gmra.mxu0 %v644
      %v782 = vpop.f32.mrf.mxu0
      %v783 = vadd.f32 %v650, %v782
      %v784 = vpop.f32.mrf.mxu0
      %v785 = vpop.f32.mrf.mxu0
      %v786 = vadd.f32 %v650, %v785
      %v787 = vpop.f32.mrf.mxu0
      %788 = vdwg.mxu0
      %v789 = vmax.f32 %v783, 0.0
      %v790 = vmax.f32 %v786, 0.0
      %v793 = vrot.slane %v789, 7
      %v794 = vrot.slane %v790, 7
      %v795 = vsel %vm637, %v793, %v794
      %v798 = vsel %vm637, 0.0, %v793
      %v799 = vpack.c.bf16 %v795, %v798
      %v800 = vpack.c.bf16 %v790, %v789
      %v802 = vlaneseq
      %v803 = vshrl.u32 %v802, 7
      %v804 = vsub.s32 0, %v803
      %v805 = vrot.slane %v617, %v804
      %v839 = vunpack.c.l.b16 %v585
      %v840 = vunpack.c.l.b16 %v586
      %v841 = vunpack.c.l.b16 %v587
      %v842 = vunpack.c.l.b16 %v588
      %v843 = vunpack.c.l.b16 %v589
      %v844 = vunpack.c.l.b16 %v590
      %v845 = vunpack.c.l.b16 %v591
      %v846 = vunpack.c.l.b16 %v592
      %v847 = vunpack.c.l.b16 %v593
      %v848 = vunpack.c.l.b16 %v594
      %v849 = vunpack.c.l.b16 %v595
      %v850 = vunpack.c.l.b16 %v596
      %v851 = vunpack.c.l.b16 %v597
      %v852 = vunpack.c.l.b16 %v598
      %v853 = vunpack.c.l.b16 %v599
      %v854 = vunpack.c.l.b16 %v600
      %v855 = vunpack.c.l.b16 %v601
      %v856 = vunpack.c.l.b16 %v602
      %v857 = vunpack.c.l.b16 %v603
      %v858 = vunpack.c.l.b16 %v604
      %v859 = vunpack.c.l.b16 %v605
      %v860 = vunpack.c.l.b16 %v606
      %v861 = vunpack.c.l.b16 %v607
      %v862 = vunpack.c.l.b16 %v608
      %v863 = vunpack.c.l.b16 %v609
      %v864 = vunpack.c.l.b16 %v610
      %v865 = vunpack.c.l.b16 %v611
      %v866 = vunpack.c.l.b16 %v612
      %v867 = vunpack.c.l.b16 %v613
      %v868 = vunpack.c.l.b16 %v614
      %v869 = vunpack.c.l.b16 %v615
      %v870 = vunpack.c.l.b16 %v616
      %v871 = vpack.c.b16 %v840, %v839
      %v872 = vpack.c.b16 %v842, %v841
      %v873 = vpack.c.b16 %v844, %v843
      %v874 = vpack.c.b16 %v846, %v845
      %v875 = vpack.c.b16 %v848, %v847
      %v876 = vpack.c.b16 %v850, %v849
      %v877 = vpack.c.b16 %v852, %v851
      %v878 = vpack.c.b16 %v854, %v853
      %v879 = vpack.c.b16 %v856, %v855
      %v880 = vpack.c.b16 %v858, %v857
      %v881 = vpack.c.b16 %v860, %v859
      %v882 = vpack.c.b16 %v862, %v861
      %v883 = vpack.c.b16 %v864, %v863
      %v884 = vpack.c.b16 %v866, %v865
      %v885 = vpack.c.b16 %v868, %v867
      %v886 = vpack.c.b16 %v870, %v869
      %903 = vmatprep.subr.bf16.mxu0 0
      %904 = vmatpush1.bf16.msra.mxu0 %v878
      %905 = vmatprep.subr.bf16.mxu0 0
      %906 = vmatpush1.bf16.msra.mxu0 %v877
      %907 = vmatprep.subr.bf16.mxu0 0
      %908 = vmatpush1.bf16.msra.mxu0 %v876
      %909 = vmatprep.subr.bf16.mxu0 0
      %910 = vmatpush1.bf16.msra.mxu0 %v875
      %911 = vmatprep.subr.bf16.mxu0 0
      %912 = vmatpush1.bf16.msra.mxu0 %v874
      %913 = vmatprep.subr.bf16.mxu0 0
      %914 = vmatpush1.bf16.msra.mxu0 %v873
      %915 = vmatprep.subr.bf16.mxu0 0
      %916 = vmatpush1.bf16.msra.mxu0 %v872
      %917 = vmatprep.subr.bf16.mxu0 0
      %918 = vmatpush1.bf16.msra.mxu0 %v871
      %919 = vmatprep.subr.bf16.mxu0 0
      %920 = vmatpush2.bf16.msra.mxu0 %v886
      %921 = vmatprep.subr.bf16.mxu0 0
      %922 = vmatpush2.bf16.msra.mxu0 %v885
      %923 = vmatprep.subr.bf16.mxu0 0
      %924 = vmatpush2.bf16.msra.mxu0 %v884
      %925 = vmatprep.subr.bf16.mxu0 0
      %926 = vmatpush2.bf16.msra.mxu0 %v883
      %927 = vmatprep.subr.bf16.mxu0 0
      %928 = vmatpush2.bf16.msra.mxu0 %v882
      %929 = vmatprep.subr.bf16.mxu0 0
      %930 = vmatpush2.bf16.msra.mxu0 %v881
      %931 = vmatprep.subr.bf16.mxu0 0
      %932 = vmatpush2.bf16.msra.mxu0 %v880
      %933 = vmatprep.subr.bf16.mxu0 0
      %934 = vmatpush2.bf16.msra.mxu0 %v879
      %935 = vmatprep.mubr.bf16.mxu0 %v800
      %936 = vmatmul.mubr.bf16.gmra.mxu0 %v799
      %v937 = vpop.f32.mrf.mxu0
      %v938 = vadd.f32 %v805, %v937
      %v939 = vpop.f32.mrf.mxu0
      %v940 = vpop.f32.mrf.mxu0
      %v941 = vadd.f32 %v805, %v940
      %v942 = vpop.f32.mrf.mxu0
      %943 = vdwg.mxu0
      %v944 = vmax.f32 %v938, 0.0
      %v945 = vmax.f32 %v941, 0.0
      %v947 = vlaneseq
      %v948 = vshrl.u32 %v947, 7
      %v949 = vsub.s32 0, %v948
      %v950 = vrot.slane %v634, %v949
      %v968 = vunpack.c.l.b16 %v618
      %v969 = vunpack.c.l.b16 %v619
      %v970 = vunpack.c.l.b16 %v620
      %v971 = vunpack.c.l.b16 %v621
      %v972 = vunpack.c.l.b16 %v622
      %v973 = vunpack.c.l.b16 %v623
      %v974 = vunpack.c.l.b16 %v624
      %v975 = vunpack.c.l.b16 %v625
      %v976 = vunpack.c.l.b16 %v626
      %v977 = vunpack.c.l.b16 %v627
      %v978 = vunpack.c.l.b16 %v628
      %v979 = vunpack.c.l.b16 %v629
      %v980 = vunpack.c.l.b16 %v630
      %v981 = vunpack.c.l.b16 %v631
      %v982 = vunpack.c.l.b16 %v632
      %v983 = vunpack.c.l.b16 %v633
      %v984 = vpack.c.b16 %v969, %v968
      %v985 = vpack.c.b16 %v971, %v970
      %v986 = vpack.c.b16 %v973, %v972
      %v987 = vpack.c.b16 %v975, %v974
      %v988 = vpack.c.b16 %v977, %v976
      %v989 = vpack.c.b16 %v979, %v978
      %v990 = vpack.c.b16 %v981, %v980
      %v991 = vpack.c.b16 %v983, %v982
      %1000 = vmatprep.subr.bf16.mxu0 0
      %1001 = vmatpush1.bf16.msra.mxu0 %v991
      %1002 = vmatprep.subr.bf16.mxu0 0
      %1003 = vmatpush1.bf16.msra.mxu0 %v990
      %1004 = vmatprep.subr.bf16.mxu0 0
      %1005 = vmatpush1.bf16.msra.mxu0 %v989
      %1006 = vmatprep.subr.bf16.mxu0 0
      %1007 = vmatpush1.bf16.msra.mxu0 %v988
      %1008 = vmatprep.subr.bf16.mxu0 0
      %1009 = vmatpush1.bf16.msra.mxu0 %v987
      %1010 = vmatprep.subr.bf16.mxu0 0
      %1011 = vmatpush1.bf16.msra.mxu0 %v986
      %1012 = vmatprep.subr.bf16.mxu0 0
      %1013 = vmatpush1.bf16.msra.mxu0 %v985
      %1014 = vmatprep.subr.bf16.mxu0 0
      %1015 = vmatpush1.bf16.msra.mxu0 %v984
      %1016 = vmatprep.subr.bf16.mxu0 0
      %1017 = vmatpush2.bf16.msra.mxu0 0
      %1018 = vmatprep.subr.bf16.mxu0 0
      %1019 = vmatpush2.bf16.msra.mxu0 0
      %1020 = vmatprep.subr.bf16.mxu0 0
      %1021 = vmatpush2.bf16.msra.mxu0 0
      %1022 = vmatprep.subr.bf16.mxu0 0
      %1023 = vmatpush2.bf16.msra.mxu0 0
      %1024 = vmatprep.subr.bf16.mxu0 0
      %1025 = vmatpush2.bf16.msra.mxu0 0
      %1026 = vmatprep.subr.bf16.mxu0 0
      %1027 = vmatpush2.bf16.msra.mxu0 0
      %1028 = vmatprep.subr.bf16.mxu0 0
      %1029 = vmatpush2.bf16.msra.mxu0 0
      %1030 = vmatprep.subr.bf16.mxu0 0
      %1031 = vmatpush2.bf16.msra.mxu0 0
      %1032 = vmatprep.mubr.bf16.mxu0 0
      %1033 = vmatmul.mubr.bf16.gmra.mxu0 %v645
      %v1034 = vpop.f32.mrf.mxu0
      %v1035 = vadd.f32 %v950, %v1034
      %v1036 = vpop.f32.mrf.mxu0
      %v1037 = vpop.f32.mrf.mxu0
      %v1038 = vadd.f32 %v950, %v1037
      %v1039 = vpop.f32.mrf.mxu0
      %1040 = vdwg.mxu0
      %v1041 = vadd.f32 %v944, %v1035
      %v1042 = vadd.f32 %v945, %v1038
      %v1043 = vmax.f32 %v1041, 0.0
      %v1044 = vmax.f32 %v1042, 0.0
      %v1045 = vld [vmem:[%s7] sm:$0xf]
      %v1046 = vld [vmem:[%s7 + $0x4] sm:$0xf]
      %v1047 = vld [vmem:[%s7 + $0x8] sm:$0xf]
      %v1048 = vld [vmem:[%s7 + $0xc] sm:$0xf]
      %v1049 = vld [vmem:[%s7 + $0x10] sm:$0xf]
      %v1050 = vld [vmem:[%s7 + $0x14] sm:$0xf]
      %v1051 = vld [vmem:[%s7 + $0x18] sm:$0xf]
      %v1052 = vld [vmem:[%s7 + $0x1c] sm:$0xf]
      %v1053 = vld [vmem:[%s7 + $0x20] sm:$0xf]
      %v1054 = vld [vmem:[%s7 + $0x24] sm:$0xf]
      %v1055 = vld [vmem:[%s7 + $0x28] sm:$0xf]
      %v1056 = vld [vmem:[%s7 + $0x2c] sm:$0xf]
      %v1057 = vld [vmem:[%s7 + $0x30] sm:$0xf]
      %v1058 = vld [vmem:[%s7 + $0x34] sm:$0xf]
      %v1059 = vld [vmem:[%s7 + $0x38] sm:$0xf]
      %v1060 = vld [vmem:[%s7 + $0x3c] sm:$0xf]
      %v1061 = vld [vmem:[%s7 + $0x40] sm:$0xf]
      %v1062 = vld [vmem:[%s7 + $0x44] sm:$0xf]
      %v1063 = vld [vmem:[%s7 + $0x48] sm:$0xf]
      %v1064 = vld [vmem:[%s7 + $0x4c] sm:$0xf]
      %v1065 = vld [vmem:[%s7 + $0x50] sm:$0xf]
      %v1066 = vld [vmem:[%s7 + $0x54] sm:$0xf]
      %v1067 = vld [vmem:[%s7 + $0x58] sm:$0xf]
      %v1068 = vld [vmem:[%s7 + $0x5c] sm:$0xf]
      %v1069 = vld [vmem:[%s7 + $0x60] sm:$0xf]
      %v1070 = vld [vmem:[%s7 + $0x64] sm:$0xf]
      %v1071 = vld [vmem:[%s7 + $0x68] sm:$0xf]
      %v1072 = vld [vmem:[%s7 + $0x6c] sm:$0xf]
      %v1073 = vld [vmem:[%s7 + $0x70] sm:$0xf]
      %v1074 = vld [vmem:[%s7 + $0x74] sm:$0xf]
      %v1075 = vld [vmem:[%s7 + $0x78] sm:$0xf]
      %v1076 = vld [vmem:[%s7 + $0x7c] sm:$0xf]
      %v1077 = vld [vmem:[%s8] sm:$0x1]
      %v1078 = vld [vmem:[%s9] sm:$0xf]
      %v1079 = vld [vmem:[%s9 + $0x4] sm:$0xf]
      %v1080 = vld [vmem:[%s9 + $0x8] sm:$0xf]
      %v1081 = vld [vmem:[%s9 + $0xc] sm:$0xf]
      %v1082 = vld [vmem:[%s9 + $0x10] sm:$0xf]
      %v1083 = vld [vmem:[%s9 + $0x14] sm:$0xf]
      %v1084 = vld [vmem:[%s9 + $0x18] sm:$0xf]
      %v1085 = vld [vmem:[%s9 + $0x1c] sm:$0xf]
      %v1086 = vld [vmem:[%s9 + $0x20] sm:$0xf]
      %v1087 = vld [vmem:[%s9 + $0x24] sm:$0xf]
      %v1088 = vld [vmem:[%s9 + $0x28] sm:$0xf]
      %v1089 = vld [vmem:[%s9 + $0x2c] sm:$0xf]
      %v1090 = vld [vmem:[%s9 + $0x30] sm:$0xf]
      %v1091 = vld [vmem:[%s9 + $0x34] sm:$0xf]
      %v1092 = vld [vmem:[%s9 + $0x38] sm:$0xf]
      %v1093 = vld [vmem:[%s9 + $0x3c] sm:$0xf]
      %v1094 = vld [vmem:[%s9 + $0x40] sm:$0xf]
      %v1095 = vld [vmem:[%s9 + $0x44] sm:$0xf]
      %v1096 = vld [vmem:[%s9 + $0x48] sm:$0xf]
      %v1097 = vld [vmem:[%s9 + $0x4c] sm:$0xf]
      %v1098 = vld [vmem:[%s9 + $0x50] sm:$0xf]
      %v1099 = vld [vmem:[%s9 + $0x54] sm:$0xf]
      %v1100 = vld [vmem:[%s9 + $0x58] sm:$0xf]
      %v1101 = vld [vmem:[%s9 + $0x5c] sm:$0xf]
      %v1102 = vld [vmem:[%s9 + $0x60] sm:$0xf]
      %v1103 = vld [vmem:[%s9 + $0x64] sm:$0xf]
      %v1104 = vld [vmem:[%s9 + $0x68] sm:$0xf]
      %v1105 = vld [vmem:[%s9 + $0x6c] sm:$0xf]
      %v1106 = vld [vmem:[%s9 + $0x70] sm:$0xf]
      %v1107 = vld [vmem:[%s9 + $0x74] sm:$0xf]
      %v1108 = vld [vmem:[%s9 + $0x78] sm:$0xf]
      %v1109 = vld [vmem:[%s9 + $0x7c] sm:$0xf]
      %v1110 = vld [vmem:[%s10] sm:$0x1]
      %v1113 = vrot.slane %v1043, 7
      %v1114 = vrot.slane %v1044, 7
      %v1115 = vsel %vm637, %v1113, %v1114
      %v1118 = vsel %vm637, 0.0, %v1113
      %vm1119 = vcmask 1046528
      %v1120 = vrot.slane %v1043, 1
      %v1121 = vrot.slane %v1044, 1
      %v1122 = vsel %vm1119, %v1120, %v1121
      %v1125 = vsel %vm1119, %v1121, 0.0
      %v1126 = vpack.c.bf16 %v1115, %v1118
      %v1127 = vpack.c.bf16 %v1125, %v1122
      %v1129 = vlaneseq
      %v1130 = vshrl.u32 %v1129, 7
      %v1131 = vsub.s32 0, %v1130
      %v1132 = vrot.slane %v1077, %v1131
      %v1166 = vunpack.c.l.b16 %v1045
      %v1167 = vunpack.c.l.b16 %v1046
      %v1168 = vunpack.c.l.b16 %v1047
      %v1169 = vunpack.c.l.b16 %v1048
      %v1170 = vunpack.c.l.b16 %v1049
      %v1171 = vunpack.c.l.b16 %v1050
      %v1172 = vunpack.c.l.b16 %v1051
      %v1173 = vunpack.c.l.b16 %v1052
      %v1174 = vunpack.c.l.b16 %v1053
      %v1175 = vunpack.c.l.b16 %v1054
      %v1176 = vunpack.c.l.b16 %v1055
      %v1177 = vunpack.c.l.b16 %v1056
      %v1178 = vunpack.c.l.b16 %v1057
      %v1179 = vunpack.c.l.b16 %v1058
      %v1180 = vunpack.c.l.b16 %v1059
      %v1181 = vunpack.c.l.b16 %v1060
      %v1182 = vunpack.c.l.b16 %v1061
      %v1183 = vunpack.c.l.b16 %v1062
      %v1184 = vunpack.c.l.b16 %v1063
      %v1185 = vunpack.c.l.b16 %v1064
      %v1186 = vunpack.c.l.b16 %v1065
      %v1187 = vunpack.c.l.b16 %v1066
      %v1188 = vunpack.c.l.b16 %v1067
      %v1189 = vunpack.c.l.b16 %v1068
      %v1190 = vunpack.c.l.b16 %v1069
      %v1191 = vunpack.c.l.b16 %v1070
      %v1192 = vunpack.c.l.b16 %v1071
      %v1193 = vunpack.c.l.b16 %v1072
      %v1194 = vunpack.c.l.b16 %v1073
      %v1195 = vunpack.c.l.b16 %v1074
      %v1196 = vunpack.c.l.b16 %v1075
      %v1197 = vunpack.c.l.b16 %v1076
      %v1198 = vpack.c.b16 %v1167, %v1166
      %v1199 = vpack.c.b16 %v1169, %v1168
      %v1200 = vpack.c.b16 %v1171, %v1170
      %v1201 = vpack.c.b16 %v1173, %v1172
      %v1202 = vpack.c.b16 %v1175, %v1174
      %v1203 = vpack.c.b16 %v1177, %v1176
      %v1204 = vpack.c.b16 %v1179, %v1178
      %v1205 = vpack.c.b16 %v1181, %v1180
      %v1206 = vpack.c.b16 %v1183, %v1182
      %v1207 = vpack.c.b16 %v1185, %v1184
      %v1208 = vpack.c.b16 %v1187, %v1186
      %v1209 = vpack.c.b16 %v1189, %v1188
      %v1210 = vpack.c.b16 %v1191, %v1190
      %v1211 = vpack.c.b16 %v1193, %v1192
      %v1212 = vpack.c.b16 %v1195, %v1194
      %v1213 = vpack.c.b16 %v1197, %v1196
      %1230 = vmatprep.subr.bf16.mxu0 0
      %1231 = vmatpush1.bf16.msra.mxu0 %v1205
      %1232 = vmatprep.subr.bf16.mxu0 0
      %1233 = vmatpush1.bf16.msra.mxu0 %v1204
      %1234 = vmatprep.subr.bf16.mxu0 0
      %1235 = vmatpush1.bf16.msra.mxu0 %v1203
      %1236 = vmatprep.subr.bf16.mxu0 0
      %1237 = vmatpush1.bf16.msra.mxu0 %v1202
      %1238 = vmatprep.subr.bf16.mxu0 0
      %1239 = vmatpush1.bf16.msra.mxu0 %v1201
      %1240 = vmatprep.subr.bf16.mxu0 0
      %1241 = vmatpush1.bf16.msra.mxu0 %v1200
      %1242 = vmatprep.subr.bf16.mxu0 0
      %1243 = vmatpush1.bf16.msra.mxu0 %v1199
      %1244 = vmatprep.subr.bf16.mxu0 0
      %1245 = vmatpush1.bf16.msra.mxu0 %v1198
      %1246 = vmatprep.subr.bf16.mxu0 0
      %1247 = vmatpush2.bf16.msra.mxu0 %v1213
      %1248 = vmatprep.subr.bf16.mxu0 0
      %1249 = vmatpush2.bf16.msra.mxu0 %v1212
      %1250 = vmatprep.subr.bf16.mxu0 0
      %1251 = vmatpush2.bf16.msra.mxu0 %v1211
      %1252 = vmatprep.subr.bf16.mxu0 0
      %1253 = vmatpush2.bf16.msra.mxu0 %v1210
      %1254 = vmatprep.subr.bf16.mxu0 0
      %1255 = vmatpush2.bf16.msra.mxu0 %v1209
      %1256 = vmatprep.subr.bf16.mxu0 0
      %1257 = vmatpush2.bf16.msra.mxu0 %v1208
      %1258 = vmatprep.subr.bf16.mxu0 0
      %1259 = vmatpush2.bf16.msra.mxu0 %v1207
      %1260 = vmatprep.subr.bf16.mxu0 0
      %1261 = vmatpush2.bf16.msra.mxu0 %v1206
      %1262 = vmatprep.mubr.bf16.mxu0 %v1127
      %1263 = vmatmul.mubr.bf16.gmra.mxu0 %v1126
      %v1264 = vpop.f32.mrf.mxu0
      %v1265 = vadd.f32 %v1132, %v1264
      %v1266 = vpop.f32.mrf.mxu0
      %v1267 = vpop.f32.mrf.mxu0
      %v1268 = vadd.f32 %v1132, %v1267
      %v1269 = vpop.f32.mrf.mxu0
      %1270 = vdwg.mxu0
      %v1271 = vmax.f32 %v1265, 0.0
      %v1272 = vmax.f32 %v1268, 0.0
      %v1275 = vrot.slane %v1271, 7
      %v1276 = vrot.slane %v1272, 7
      %v1277 = vsel %vm637, %v1275, %v1276
      %v1280 = vsel %vm637, 0.0, %v1275
      %v1281 = vrot.slane %v1271, 1
      %v1282 = vrot.slane %v1272, 1
      %v1283 = vsel %vm1119, %v1281, %v1282
      %v1286 = vsel %vm1119, %v1282, 0.0
      %v1287 = vpack.c.bf16 %v1277, %v1280
      %v1288 = vpack.c.bf16 %v1286, %v1283
      %v1290 = vlaneseq
      %v1291 = vshrl.u32 %v1290, 7
      %v1292 = vsub.s32 0, %v1291
      %v1293 = vrot.slane %v1110, %v1292
      %v1327 = vunpack.c.l.b16 %v1078
      %v1328 = vunpack.c.l.b16 %v1079
      %v1329 = vunpack.c.l.b16 %v1080
      %v1330 = vunpack.c.l.b16 %v1081
      %v1331 = vunpack.c.l.b16 %v1082
      %v1332 = vunpack.c.l.b16 %v1083
      %v1333 = vunpack.c.l.b16 %v1084
      %v1334 = vunpack.c.l.b16 %v1085
      %v1335 = vunpack.c.l.b16 %v1086
      %v1336 = vunpack.c.l.b16 %v1087
      %v1337 = vunpack.c.l.b16 %v1088
      %v1338 = vunpack.c.l.b16 %v1089
      %v1339 = vunpack.c.l.b16 %v1090
      %v1340 = vunpack.c.l.b16 %v1091
      %v1341 = vunpack.c.l.b16 %v1092
      %v1342 = vunpack.c.l.b16 %v1093
      %v1343 = vunpack.c.l.b16 %v1094
      %v1344 = vunpack.c.l.b16 %v1095
      %v1345 = vunpack.c.l.b16 %v1096
      %v1346 = vunpack.c.l.b16 %v1097
      %v1347 = vunpack.c.l.b16 %v1098
      %v1348 = vunpack.c.l.b16 %v1099
      %v1349 = vunpack.c.l.b16 %v1100
      %v1350 = vunpack.c.l.b16 %v1101
      %v1351 = vunpack.c.l.b16 %v1102
      %v1352 = vunpack.c.l.b16 %v1103
      %v1353 = vunpack.c.l.b16 %v1104
      %v1354 = vunpack.c.l.b16 %v1105
      %v1355 = vunpack.c.l.b16 %v1106
      %v1356 = vunpack.c.l.b16 %v1107
      %v1357 = vunpack.c.l.b16 %v1108
      %v1358 = vunpack.c.l.b16 %v1109
      %v1359 = vpack.c.b16 %v1328, %v1327
      %v1360 = vpack.c.b16 %v1330, %v1329
      %v1361 = vpack.c.b16 %v1332, %v1331
      %v1362 = vpack.c.b16 %v1334, %v1333
      %v1363 = vpack.c.b16 %v1336, %v1335
      %v1364 = vpack.c.b16 %v1338, %v1337
      %v1365 = vpack.c.b16 %v1340, %v1339
      %v1366 = vpack.c.b16 %v1342, %v1341
      %v1367 = vpack.c.b16 %v1344, %v1343
      %v1368 = vpack.c.b16 %v1346, %v1345
      %v1369 = vpack.c.b16 %v1348, %v1347
      %v1370 = vpack.c.b16 %v1350, %v1349
      %v1371 = vpack.c.b16 %v1352, %v1351
      %v1372 = vpack.c.b16 %v1354, %v1353
      %v1373 = vpack.c.b16 %v1356, %v1355
      %v1374 = vpack.c.b16 %v1358, %v1357
      %1391 = vmatprep.subr.bf16.mxu0 0
      %1392 = vmatpush1.bf16.msra.mxu0 %v1366
      %1393 = vmatprep.subr.bf16.mxu0 0
      %1394 = vmatpush1.bf16.msra.mxu0 %v1365
      %1395 = vmatprep.subr.bf16.mxu0 0
      %1396 = vmatpush1.bf16.msra.mxu0 %v1364
      %1397 = vmatprep.subr.bf16.mxu0 0
      %1398 = vmatpush1.bf16.msra.mxu0 %v1363
      %1399 = vmatprep.subr.bf16.mxu0 0
      %1400 = vmatpush1.bf16.msra.mxu0 %v1362
      %1401 = vmatprep.subr.bf16.mxu0 0
      %1402 = vmatpush1.bf16.msra.mxu0 %v1361
      %1403 = vmatprep.subr.bf16.mxu0 0
      %1404 = vmatpush1.bf16.msra.mxu0 %v1360
      %1405 = vmatprep.subr.bf16.mxu0 0
      %1406 = vmatpush1.bf16.msra.mxu0 %v1359
      %1407 = vmatprep.subr.bf16.mxu0 0
      %1408 = vmatpush2.bf16.msra.mxu0 %v1374
      %1409 = vmatprep.subr.bf16.mxu0 0
      %1410 = vmatpush2.bf16.msra.mxu0 %v1373
      %1411 = vmatprep.subr.bf16.mxu0 0
      %1412 = vmatpush2.bf16.msra.mxu0 %v1372
      %1413 = vmatprep.subr.bf16.mxu0 0
      %1414 = vmatpush2.bf16.msra.mxu0 %v1371
      %1415 = vmatprep.subr.bf16.mxu0 0
      %1416 = vmatpush2.bf16.msra.mxu0 %v1370
      %1417 = vmatprep.subr.bf16.mxu0 0
      %1418 = vmatpush2.bf16.msra.mxu0 %v1369
      %1419 = vmatprep.subr.bf16.mxu0 0
      %1420 = vmatpush2.bf16.msra.mxu0 %v1368
      %1421 = vmatprep.subr.bf16.mxu0 0
      %1422 = vmatpush2.bf16.msra.mxu0 %v1367
      %1423 = vmatprep.mubr.bf16.mxu0 %v1288
      %1424 = vmatmul.mubr.bf16.gmra.mxu0 %v1287
      %v1425 = vpop.f32.mrf.mxu0
      %v1426 = vadd.f32 %v1293, %v1425
      %v1427 = vpop.f32.mrf.mxu0
      %v1428 = vpop.f32.mrf.mxu0
      %v1429 = vadd.f32 %v1293, %v1428
      %v1430 = vpop.f32.mrf.mxu0
      %1431 = vdwg.mxu0
      %v1432 = vmax.f32 %v1426, 0.0
      %v1433 = vmax.f32 %v1429, 0.0
      %v1434 = vadd.f32 %v1432, %v1043
      %v1435 = vadd.f32 %v1433, %v1044
      %v1436 = vmax.f32 %v1434, 0.0
      %v1437 = vmax.f32 %v1435, 0.0
      %v1438 = vld [vmem:[%s11] sm:$0xf]
      %v1439 = vld [vmem:[%s11 + $0x4] sm:$0xf]
      %v1440 = vld [vmem:[%s11 + $0x8] sm:$0xf]
      %v1441 = vld [vmem:[%s11 + $0xc] sm:$0xf]
      %v1442 = vld [vmem:[%s11 + $0x10] sm:$0xf]
      %v1443 = vld [vmem:[%s11 + $0x14] sm:$0xf]
      %v1444 = vld [vmem:[%s11 + $0x18] sm:$0xf]
      %v1445 = vld [vmem:[%s11 + $0x1c] sm:$0xf]
      %v1446 = vld [vmem:[%s11 + $0x20] sm:$0xf]
      %v1447 = vld [vmem:[%s11 + $0x24] sm:$0xf]
      %v1448 = vld [vmem:[%s11 + $0x28] sm:$0xf]
      %v1449 = vld [vmem:[%s11 + $0x2c] sm:$0xf]
      %v1450 = vld [vmem:[%s11 + $0x30] sm:$0xf]
      %v1451 = vld [vmem:[%s11 + $0x34] sm:$0xf]
      %v1452 = vld [vmem:[%s11 + $0x38] sm:$0xf]
      %v1453 = vld [vmem:[%s11 + $0x3c] sm:$0xf]
      %v1454 = vld [vmem:[%s11 + $0x40] sm:$0xf]
      %v1455 = vld [vmem:[%s11 + $0x44] sm:$0xf]
      %v1456 = vld [vmem:[%s11 + $0x48] sm:$0xf]
      %v1457 = vld [vmem:[%s11 + $0x4c] sm:$0xf]
      %v1458 = vld [vmem:[%s11 + $0x50] sm:$0xf]
      %v1459 = vld [vmem:[%s11 + $0x54] sm:$0xf]
      %v1460 = vld [vmem:[%s11 + $0x58] sm:$0xf]
      %v1461 = vld [vmem:[%s11 + $0x5c] sm:$0xf]
      %v1462 = vld [vmem:[%s11 + $0x60] sm:$0xf]
      %v1463 = vld [vmem:[%s11 + $0x64] sm:$0xf]
      %v1464 = vld [vmem:[%s11 + $0x68] sm:$0xf]
      %v1465 = vld [vmem:[%s11 + $0x6c] sm:$0xf]
      %v1466 = vld [vmem:[%s11 + $0x70] sm:$0xf]
      %v1467 = vld [vmem:[%s11 + $0x74] sm:$0xf]
      %v1468 = vld [vmem:[%s11 + $0x78] sm:$0xf]
      %v1469 = vld [vmem:[%s11 + $0x7c] sm:$0xf]
      %v1470 = vld [vmem:[%s12] sm:$0x1]
      %v1471 = vld [vmem:[%s13] sm:$0xf]
      %v1472 = vld [vmem:[%s13 + $0x4] sm:$0xf]
      %v1473 = vld [vmem:[%s13 + $0x8] sm:$0xf]
      %v1474 = vld [vmem:[%s13 + $0xc] sm:$0xf]
      %v1475 = vld [vmem:[%s13 + $0x10] sm:$0xf]
      %v1476 = vld [vmem:[%s13 + $0x14] sm:$0xf]
      %v1477 = vld [vmem:[%s13 + $0x18] sm:$0xf]
      %v1478 = vld [vmem:[%s13 + $0x1c] sm:$0xf]
      %v1479 = vld [vmem:[%s13 + $0x20] sm:$0xf]
      %v1480 = vld [vmem:[%s13 + $0x24] sm:$0xf]
      %v1481 = vld [vmem:[%s13 + $0x28] sm:$0xf]
      %v1482 = vld [vmem:[%s13 + $0x2c] sm:$0xf]
      %v1483 = vld [vmem:[%s13 + $0x30] sm:$0xf]
      %v1484 = vld [vmem:[%s13 + $0x34] sm:$0xf]
      %v1485 = vld [vmem:[%s13 + $0x38] sm:$0xf]
      %v1486 = vld [vmem:[%s13 + $0x3c] sm:$0xf]
      %v1487 = vld [vmem:[%s13 + $0x40] sm:$0xf]
      %v1488 = vld [vmem:[%s13 + $0x44] sm:$0xf]
      %v1489 = vld [vmem:[%s13 + $0x48] sm:$0xf]
      %v1490 = vld [vmem:[%s13 + $0x4c] sm:$0xf]
      %v1491 = vld [vmem:[%s13 + $0x50] sm:$0xf]
      %v1492 = vld [vmem:[%s13 + $0x54] sm:$0xf]
      %v1493 = vld [vmem:[%s13 + $0x58] sm:$0xf]
      %v1494 = vld [vmem:[%s13 + $0x5c] sm:$0xf]
      %v1495 = vld [vmem:[%s13 + $0x60] sm:$0xf]
      %v1496 = vld [vmem:[%s13 + $0x64] sm:$0xf]
      %v1497 = vld [vmem:[%s13 + $0x68] sm:$0xf]
      %v1498 = vld [vmem:[%s13 + $0x6c] sm:$0xf]
      %v1499 = vld [vmem:[%s13 + $0x70] sm:$0xf]
      %v1500 = vld [vmem:[%s13 + $0x74] sm:$0xf]
      %v1501 = vld [vmem:[%s13 + $0x78] sm:$0xf]
      %v1502 = vld [vmem:[%s13 + $0x7c] sm:$0xf]
      %v1503 = vld [vmem:[%s14] sm:$0x1]
      %v1504 = vld [vmem:[%s15] sm:$0xf]
      %v1505 = vld [vmem:[%s15 + $0x4] sm:$0xf]
      %v1506 = vld [vmem:[%s15 + $0x8] sm:$0xf]
      %v1507 = vld [vmem:[%s15 + $0xc] sm:$0xf]
      %v1508 = vld [vmem:[%s15 + $0x10] sm:$0xf]
      %v1509 = vld [vmem:[%s15 + $0x14] sm:$0xf]
      %v1510 = vld [vmem:[%s15 + $0x18] sm:$0xf]
      %v1511 = vld [vmem:[%s15 + $0x1c] sm:$0xf]
      %v1512 = vld [vmem:[%s15 + $0x20] sm:$0xf]
      %v1513 = vld [vmem:[%s15 + $0x24] sm:$0xf]
      %v1514 = vld [vmem:[%s15 + $0x28] sm:$0xf]
      %v1515 = vld [vmem:[%s15 + $0x2c] sm:$0xf]
      %v1516 = vld [vmem:[%s15 + $0x30] sm:$0xf]
      %v1517 = vld [vmem:[%s15 + $0x34] sm:$0xf]
      %v1518 = vld [vmem:[%s15 + $0x38] sm:$0xf]
      %v1519 = vld [vmem:[%s15 + $0x3c] sm:$0xf]
      %v1520 = vld [vmem:[%s16] sm:$0x1]
      %vm1523 = vcmask 1041408
      %v1524 = vrot.slane %v1436, 6
      %v1525 = vrot.slane %v1437, 6
      %v1526 = vsel %vm1523, %v1524, %v1525
      %v1529 = vsel %vm1523, 0.0, %v1524
      %vm1530 = vcmask 1045504
      %v1531 = vrot.slane %v1436, 2
      %v1532 = vrot.slane %v1437, 2
      %v1533 = vsel %vm1530, %v1531, %v1532
      %v1536 = vsel %vm1530, %v1532, 0.0
      %v1537 = vpack.c.bf16 %v1526, %v1529
      %v1538 = vpack.c.bf16 %v1536, %v1533
      %v1540 = vlaneseq
      %v1541 = vshrl.u32 %v1540, 7
      %v1542 = vsub.s32 0, %v1541
      %v1543 = vrot.slane %v1470, %v1542
      %v1577 = vunpack.c.l.b16 %v1438
      %v1578 = vunpack.c.l.b16 %v1439
      %v1579 = vunpack.c.l.b16 %v1440
      %v1580 = vunpack.c.l.b16 %v1441
      %v1581 = vunpack.c.l.b16 %v1442
      %v1582 = vunpack.c.l.b16 %v1443
      %v1583 = vunpack.c.l.b16 %v1444
      %v1584 = vunpack.c.l.b16 %v1445
      %v1585 = vunpack.c.l.b16 %v1446
      %v1586 = vunpack.c.l.b16 %v1447
      %v1587 = vunpack.c.l.b16 %v1448
      %v1588 = vunpack.c.l.b16 %v1449
      %v1589 = vunpack.c.l.b16 %v1450
      %v1590 = vunpack.c.l.b16 %v1451
      %v1591 = vunpack.c.l.b16 %v1452
      %v1592 = vunpack.c.l.b16 %v1453
      %v1593 = vunpack.c.l.b16 %v1454
      %v1594 = vunpack.c.l.b16 %v1455
      %v1595 = vunpack.c.l.b16 %v1456
      %v1596 = vunpack.c.l.b16 %v1457
      %v1597 = vunpack.c.l.b16 %v1458
      %v1598 = vunpack.c.l.b16 %v1459
      %v1599 = vunpack.c.l.b16 %v1460
      %v1600 = vunpack.c.l.b16 %v1461
      %v1601 = vunpack.c.l.b16 %v1462
      %v1602 = vunpack.c.l.b16 %v1463
      %v1603 = vunpack.c.l.b16 %v1464
      %v1604 = vunpack.c.l.b16 %v1465
      %v1605 = vunpack.c.l.b16 %v1466
      %v1606 = vunpack.c.l.b16 %v1467
      %v1607 = vunpack.c.l.b16 %v1468
      %v1608 = vunpack.c.l.b16 %v1469
      %v1609 = vpack.c.b16 %v1578, %v1577
      %v1610 = vpack.c.b16 %v1580, %v1579
      %v1611 = vpack.c.b16 %v1582, %v1581
      %v1612 = vpack.c.b16 %v1584, %v1583
      %v1613 = vpack.c.b16 %v1586, %v1585
      %v1614 = vpack.c.b16 %v1588, %v1587
      %v1615 = vpack.c.b16 %v1590, %v1589
      %v1616 = vpack.c.b16 %v1592, %v1591
      %v1617 = vpack.c.b16 %v1594, %v1593
      %v1618 = vpack.c.b16 %v1596, %v1595
      %v1619 = vpack.c.b16 %v1598, %v1597
      %v1620 = vpack.c.b16 %v1600, %v1599
      %v1621 = vpack.c.b16 %v1602, %v1601
      %v1622 = vpack.c.b16 %v1604, %v1603
      %v1623 = vpack.c.b16 %v1606, %v1605
      %v1624 = vpack.c.b16 %v1608, %v1607
      %1641 = vmatprep.subr.bf16.mxu0 0
      %1642 = vmatpush1.bf16.msra.mxu0 %v1616
      %1643 = vmatprep.subr.bf16.mxu0 0
      %1644 = vmatpush1.bf16.msra.mxu0 %v1615
      %1645 = vmatprep.subr.bf16.mxu0 0
      %1646 = vmatpush1.bf16.msra.mxu0 %v1614
      %1647 = vmatprep.subr.bf16.mxu0 0
      %1648 = vmatpush1.bf16.msra.mxu0 %v1613
      %1649 = vmatprep.subr.bf16.mxu0 0
      %1650 = vmatpush1.bf16.msra.mxu0 %v1612
      %1651 = vmatprep.subr.bf16.mxu0 0
      %1652 = vmatpush1.bf16.msra.mxu0 %v1611
      %1653 = vmatprep.subr.bf16.mxu0 0
      %1654 = vmatpush1.bf16.msra.mxu0 %v1610
      %1655 = vmatprep.subr.bf16.mxu0 0
      %1656 = vmatpush1.bf16.msra.mxu0 %v1609
      %1657 = vmatprep.subr.bf16.mxu0 0
      %1658 = vmatpush2.bf16.msra.mxu0 %v1624
      %1659 = vmatprep.subr.bf16.mxu0 0
      %1660 = vmatpush2.bf16.msra.mxu0 %v1623
      %1661 = vmatprep.subr.bf16.mxu0 0
      %1662 = vmatpush2.bf16.msra.mxu0 %v1622
      %1663 = vmatprep.subr.bf16.mxu0 0
      %1664 = vmatpush2.bf16.msra.mxu0 %v1621
      %1665 = vmatprep.subr.bf16.mxu0 0
      %1666 = vmatpush2.bf16.msra.mxu0 %v1620
      %1667 = vmatprep.subr.bf16.mxu0 0
      %1668 = vmatpush2.bf16.msra.mxu0 %v1619
      %1669 = vmatprep.subr.bf16.mxu0 0
      %1670 = vmatpush2.bf16.msra.mxu0 %v1618
      %1671 = vmatprep.subr.bf16.mxu0 0
      %1672 = vmatpush2.bf16.msra.mxu0 %v1617
      %1673 = vmatprep.mubr.bf16.mxu0 %v1538
      %1674 = vmatmul.mubr.bf16.gmra.mxu0 %v1537
      %v1675 = vpop.f32.mrf.mxu0
      %v1676 = vadd.f32 %v1543, %v1675
      %v1677 = vpop.f32.mrf.mxu0
      %v1678 = vpop.f32.mrf.mxu0
      %v1679 = vadd.f32 %v1543, %v1678
      %v1680 = vpop.f32.mrf.mxu0
      %1681 = vdwg.mxu0
      %v1682 = vmax.f32 %v1676, 0.0
      %v1683 = vmax.f32 %v1679, 0.0
      %v1686 = vrot.slane %v1682, 6
      %v1687 = vrot.slane %v1683, 6
      %v1688 = vsel %vm1523, %v1686, %v1687
      %v1691 = vsel %vm1523, 0.0, %v1686
      %v1692 = vrot.slane %v1682, 2
      %v1693 = vrot.slane %v1683, 2
      %v1694 = vsel %vm1530, %v1692, %v1693
      %v1697 = vsel %vm1530, %v1693, 0.0
      %v1698 = vpack.c.bf16 %v1688, %v1691
      %v1699 = vpack.c.bf16 %v1697, %v1694
      %v1701 = vlaneseq
      %v1702 = vshrl.u32 %v1701, 7
      %v1703 = vsub.s32 0, %v1702
      %v1704 = vrot.slane %v1503, %v1703
      %v1738 = vunpack.c.l.b16 %v1471
      %v1739 = vunpack.c.l.b16 %v1472
      %v1740 = vunpack.c.l.b16 %v1473
      %v1741 = vunpack.c.l.b16 %v1474
      %v1742 = vunpack.c.l.b16 %v1475
      %v1743 = vunpack.c.l.b16 %v1476
      %v1744 = vunpack.c.l.b16 %v1477
      %v1745 = vunpack.c.l.b16 %v1478
      %v1746 = vunpack.c.l.b16 %v1479
      %v1747 = vunpack.c.l.b16 %v1480
      %v1748 = vunpack.c.l.b16 %v1481
      %v1749 = vunpack.c.l.b16 %v1482
      %v1750 = vunpack.c.l.b16 %v1483
      %v1751 = vunpack.c.l.b16 %v1484
      %v1752 = vunpack.c.l.b16 %v1485
      %v1753 = vunpack.c.l.b16 %v1486
      %v1754 = vunpack.c.l.b16 %v1487
      %v1755 = vunpack.c.l.b16 %v1488
      %v1756 = vunpack.c.l.b16 %v1489
      %v1757 = vunpack.c.l.b16 %v1490
      %v1758 = vunpack.c.l.b16 %v1491
      %v1759 = vunpack.c.l.b16 %v1492
      %v1760 = vunpack.c.l.b16 %v1493
      %v1761 = vunpack.c.l.b16 %v1494
      %v1762 = vunpack.c.l.b16 %v1495
      %v1763 = vunpack.c.l.b16 %v1496
      %v1764 = vunpack.c.l.b16 %v1497
      %v1765 = vunpack.c.l.b16 %v1498
      %v1766 = vunpack.c.l.b16 %v1499
      %v1767 = vunpack.c.l.b16 %v1500
      %v1768 = vunpack.c.l.b16 %v1501
      %v1769 = vunpack.c.l.b16 %v1502
      %v1770 = vpack.c.b16 %v1739, %v1738
      %v1771 = vpack.c.b16 %v1741, %v1740
      %v1772 = vpack.c.b16 %v1743, %v1742
      %v1773 = vpack.c.b16 %v1745, %v1744
      %v1774 = vpack.c.b16 %v1747, %v1746
      %v1775 = vpack.c.b16 %v1749, %v1748
      %v1776 = vpack.c.b16 %v1751, %v1750
      %v1777 = vpack.c.b16 %v1753, %v1752
      %v1778 = vpack.c.b16 %v1755, %v1754
      %v1779 = vpack.c.b16 %v1757, %v1756
      %v1780 = vpack.c.b16 %v1759, %v1758
      %v1781 = vpack.c.b16 %v1761, %v1760
      %v1782 = vpack.c.b16 %v1763, %v1762
      %v1783 = vpack.c.b16 %v1765, %v1764
      %v1784 = vpack.c.b16 %v1767, %v1766
      %v1785 = vpack.c.b16 %v1769, %v1768
      %1802 = vmatprep.subr.bf16.mxu0 0
      %1803 = vmatpush1.bf16.msra.mxu0 %v1777
      %1804 = vmatprep.subr.bf16.mxu0 0
      %1805 = vmatpush1.bf16.msra.mxu0 %v1776
      %1806 = vmatprep.subr.bf16.mxu0 0
      %1807 = vmatpush1.bf16.msra.mxu0 %v1775
      %1808 = vmatprep.subr.bf16.mxu0 0
      %1809 = vmatpush1.bf16.msra.mxu0 %v1774
      %1810 = vmatprep.subr.bf16.mxu0 0
      %1811 = vmatpush1.bf16.msra.mxu0 %v1773
      %1812 = vmatprep.subr.bf16.mxu0 0
      %1813 = vmatpush1.bf16.msra.mxu0 %v1772
      %1814 = vmatprep.subr.bf16.mxu0 0
      %1815 = vmatpush1.bf16.msra.mxu0 %v1771
      %1816 = vmatprep.subr.bf16.mxu0 0
      %1817 = vmatpush1.bf16.msra.mxu0 %v1770
      %1818 = vmatprep.subr.bf16.mxu0 0
      %1819 = vmatpush2.bf16.msra.mxu0 %v1785
      %1820 = vmatprep.subr.bf16.mxu0 0
      %1821 = vmatpush2.bf16.msra.mxu0 %v1784
      %1822 = vmatprep.subr.bf16.mxu0 0
      %1823 = vmatpush2.bf16.msra.mxu0 %v1783
      %1824 = vmatprep.subr.bf16.mxu0 0
      %1825 = vmatpush2.bf16.msra.mxu0 %v1782
      %1826 = vmatprep.subr.bf16.mxu0 0
      %1827 = vmatpush2.bf16.msra.mxu0 %v1781
      %1828 = vmatprep.subr.bf16.mxu0 0
      %1829 = vmatpush2.bf16.msra.mxu0 %v1780
      %1830 = vmatprep.subr.bf16.mxu0 0
      %1831 = vmatpush2.bf16.msra.mxu0 %v1779
      %1832 = vmatprep.subr.bf16.mxu0 0
      %1833 = vmatpush2.bf16.msra.mxu0 %v1778
      %1834 = vmatprep.mubr.bf16.mxu0 %v1699
      %1835 = vmatmul.mubr.bf16.gmra.mxu0 %v1698
      %v1836 = vpop.f32.mrf.mxu0
      %v1837 = vadd.f32 %v1704, %v1836
      %v1838 = vpop.f32.mrf.mxu0
      %v1839 = vpop.f32.mrf.mxu0
      %v1840 = vadd.f32 %v1704, %v1839
      %v1841 = vpop.f32.mrf.mxu0
      %1842 = vdwg.mxu0
      %v1843 = vmax.f32 %v1837, 0.0
      %v1844 = vmax.f32 %v1840, 0.0
      %v1845 = vpack.c.bf16 %v1437, %v1436
      %v1847 = vlaneseq
      %v1848 = vshrl.u32 %v1847, 7
      %v1849 = vsub.s32 0, %v1848
      %v1850 = vrot.slane %v1520, %v1849
      %v1868 = vunpack.c.l.b16 %v1504
      %v1869 = vunpack.c.l.b16 %v1505
      %v1870 = vunpack.c.l.b16 %v1506
      %v1871 = vunpack.c.l.b16 %v1507
      %v1872 = vunpack.c.l.b16 %v1508
      %v1873 = vunpack.c.l.b16 %v1509
      %v1874 = vunpack.c.l.b16 %v1510
      %v1875 = vunpack.c.l.b16 %v1511
      %v1876 = vunpack.c.l.b16 %v1512
      %v1877 = vunpack.c.l.b16 %v1513
      %v1878 = vunpack.c.l.b16 %v1514
      %v1879 = vunpack.c.l.b16 %v1515
      %v1880 = vunpack.c.l.b16 %v1516
      %v1881 = vunpack.c.l.b16 %v1517
      %v1882 = vunpack.c.l.b16 %v1518
      %v1883 = vunpack.c.l.b16 %v1519
      %v1884 = vpack.c.b16 %v1869, %v1868
      %v1885 = vpack.c.b16 %v1871, %v1870
      %v1886 = vpack.c.b16 %v1873, %v1872
      %v1887 = vpack.c.b16 %v1875, %v1874
      %v1888 = vpack.c.b16 %v1877, %v1876
      %v1889 = vpack.c.b16 %v1879, %v1878
      %v1890 = vpack.c.b16 %v1881, %v1880
      %v1891 = vpack.c.b16 %v1883, %v1882
      %1900 = vmatprep.subr.bf16.mxu0 0
      %1901 = vmatpush1.bf16.msra.mxu0 %v1891
      %1902 = vmatprep.subr.bf16.mxu0 0
      %1903 = vmatpush1.bf16.msra.mxu0 %v1890
      %1904 = vmatprep.subr.bf16.mxu0 0
      %1905 = vmatpush1.bf16.msra.mxu0 %v1889
      %1906 = vmatprep.subr.bf16.mxu0 0
      %1907 = vmatpush1.bf16.msra.mxu0 %v1888
      %1908 = vmatprep.subr.bf16.mxu0 0
      %1909 = vmatpush1.bf16.msra.mxu0 %v1887
      %1910 = vmatprep.subr.bf16.mxu0 0
      %1911 = vmatpush1.bf16.msra.mxu0 %v1886
      %1912 = vmatprep.subr.bf16.mxu0 0
      %1913 = vmatpush1.bf16.msra.mxu0 %v1885
      %1914 = vmatprep.subr.bf16.mxu0 0
      %1915 = vmatpush1.bf16.msra.mxu0 %v1884
      %1916 = vmatprep.subr.bf16.mxu0 0
      %1917 = vmatpush2.bf16.msra.mxu0 0
      %1918 = vmatprep.subr.bf16.mxu0 0
      %1919 = vmatpush2.bf16.msra.mxu0 0
      %1920 = vmatprep.subr.bf16.mxu0 0
      %1921 = vmatpush2.bf16.msra.mxu0 0
      %1922 = vmatprep.subr.bf16.mxu0 0
      %1923 = vmatpush2.bf16.msra.mxu0 0
      %1924 = vmatprep.subr.bf16.mxu0 0
      %1925 = vmatpush2.bf16.msra.mxu0 0
      %1926 = vmatprep.subr.bf16.mxu0 0
      %1927 = vmatpush2.bf16.msra.mxu0 0
      %1928 = vmatprep.subr.bf16.mxu0 0
      %1929 = vmatpush2.bf16.msra.mxu0 0
      %1930 = vmatprep.subr.bf16.mxu0 0
      %1931 = vmatpush2.bf16.msra.mxu0 0
      %1932 = vmatprep.mubr.bf16.mxu0 0
      %1933 = vmatmul.mubr.bf16.gmra.mxu0 %v1845
      %v1934 = vpop.f32.mrf.mxu0
      %v1935 = vadd.f32 %v1850, %v1934
      %v1936 = vpop.f32.mrf.mxu0
      %v1937 = vpop.f32.mrf.mxu0
      %v1938 = vadd.f32 %v1850, %v1937
      %v1939 = vpop.f32.mrf.mxu0
      %1940 = vdwg.mxu0
      %v1941 = vadd.f32 %v1843, %v1935
      %v1942 = vadd.f32 %v1844, %v1938
      %v1943 = vmax.f32 %v1941, 0.0
      %v1944 = vmax.f32 %v1942, 0.0
      %1945 = vst [vmem:[%s548] sm:$0xff] %v1943
      %1946 = vst [vmem:[%s548 + $0x8] sm:$0xff] %v1944
      %p1947 = scmp.lt.s32.totalorder %s28, 1
      %s1948 = scalar_select %p1947, %s28, 1
      %s1949 = smul.addr %s1948, 2
      %s1950 = smul.addr %s1949, 8
      %s1951 = scalar_lea.vmem %s17, %s1950
      // Predicated region
      $region89: #{temporal_conv_net.1} parent=87 // pred_check
        %p1952 = pneg %p408
      $region90: #{temporal_conv_net.1} parent=87 // pred_check_branch
        %1954 = sbr.rel (%p1952) target = $region92
      $region91: #{temporal_conv_net.1} parent=87 // pred_region
        _
      $region92: #{temporal_conv_net.1} parent=87 // pred_fallthru
        _
    $region88: #{temporal_conv_net.1} parent=5 // pred_fallthru
      _
    %p1955 = scmp.le.s32.totalorder 2, %s23
    // Predicated region
    $region93: #{temporal_conv_net.1} parent=5 // pred_check
      %p1956 = pneg %p1955
    $region94: #{temporal_conv_net.1} parent=5 // pred_check_branch
      %1958 = sbr.rel (%p1956) target = $region96
    $region95: #{temporal_conv_net.1} parent=5 // pred_region
      %s1959 = ssub.s32 %s23, 2
      // Predicated region
      $region97: #{temporal_conv_net.1} parent=95 // pred_check
        %p1960 = pneg %p414
      $region98: #{temporal_conv_net.1} parent=95 // pred_check_branch
        %1962 = sbr.rel (%p1960) target = $region100
      $region99: #{temporal_conv_net.1} parent=95 // pred_region
        %p1963 = scmp.lt.s32.totalorder %s29, 1
        %s1964 = scalar_select %p1963, %s29, 1
        %s1965 = smul.addr %s1964, 2
        %s1966 = smul.addr %s1965, 8
        %s1967 = scalar_lea.vmem %s17, %s1966
      $region100: #{temporal_conv_net.1} parent=95 // pred_fallthru
        _
    $region96: #{temporal_conv_net.1} parent=5 // pred_fallthru
      _
  $region6: #{temporal_conv_net.1} parent=0 // loop_footer
    %s27 = sadd.s32 1, %s23
  $region7: #{temporal_conv_net.1} parent=0 // loop_footer_branch
    %22 = sbr.rel target = $region3
  $region8: #{temporal_conv_net.1} parent=0 // loop_exit
    _

</llo_original>
